<compile_context>
chip_gen: v6e
topology: v6e:2x2x1
jax: 0.10.0
libtpu: 0.0.40
codegen_flags: <defaults>
</compile_context>

<pallas_src>
import functools
import math

import jax
import jax.numpy as jnp
from jax import lax
from jax.experimental import pallas as pl
from jax.experimental.pallas import tpu as pltpu


_VMEM_LIMIT_BYTES = 48 * 1024 * 1024  # <= v7x 64 MiB physical with headroom.


# ---------------------------------------------------------------------------
# Helpers
# ---------------------------------------------------------------------------
def _sublane_align(dtype):
    """Sublane alignment for the second-to-last tile dim (dtype packing aware)."""
    return max(8, 32 // jnp.dtype(dtype).itemsize)   # f32->8, bf16->16, int8->32


def _pick_tile(dim, cap, align):
    """Largest tile <= cap that divides `dim` and is a multiple of `align`.

    Falls back to the full dim (block == full array dim is always legal).
    NOTE: the fallback can produce one giant block for awkward dims; fine for
    the shapes used here."""
    if dim <= cap:
        return dim
    t = (cap // align) * align
    while t >= align:
        if dim % t == 0:
            return t
        t -= align
    return dim


def _pick_head_block(num_heads, d_k):
    """Smallest head-group size Hblk dividing num_heads with Hblk*d_k % 128 == 0,
    else all heads (block width == full D, which is always a legal block)."""
    target = -(-128 // d_k)  # ceil(128 / d_k)
    for hb in range(target, num_heads):
        if num_heads % hb == 0 and (hb * d_k) % 128 == 0:
            return hb
    return num_heads


# ---------------------------------------------------------------------------
# Tiled matmul + bias kernel:  y = x @ W + b
# Reduction (K) axis is the LAST grid axis; accumulator lives in f32 VMEM.
# ---------------------------------------------------------------------------
def _matmul_bias_kernel(x_ref, w_ref, b_ref, o_ref, acc_ref, *, k_axis):
    kk = pl.program_id(k_axis)

    @pl.when(kk == 0)
    def _init():
        acc_ref[...] = jnp.zeros_like(acc_ref)

    acc_ref[...] += jnp.dot(
        x_ref[...], w_ref[...], preferred_element_type=jnp.float32
    )

    @pl.when(kk == pl.num_programs(k_axis) - 1)
    def _store():
        o_ref[...] = (acc_ref[...] + b_ref[...]).astype(o_ref.dtype)


def linear(x, w, b, *, out_dtype=jnp.float32, tm_cap=512, tn_cap=512, tk_cap=512):
    """x: (M, K), w: (K, N), b: (N,) -> (M, N) in out_dtype (f32 accumulation)."""
    M, K = x.shape
    K2, N = w.shape
    assert K == K2
    align = _sublane_align(x.dtype)
    tm = _pick_tile(M, tm_cap, align)
    tn = _pick_tile(N, tn_cap, 128)
    tk = _pick_tile(K, tk_cap, 128)
    esx = jnp.dtype(x.dtype).itemsize
    esw = jnp.dtype(w.dtype).itemsize
    eso = jnp.dtype(out_dtype).itemsize
    cost = pl.CostEstimate(
        flops=2 * M * N * K,
        transcendentals=0,
        bytes_accessed=(esx * (N // tn) * M * K      # x re-streamed per N tile
                        + esw * (M // tm) * K * N    # w re-streamed per M tile
                        + eso * M * N + 4 * N),
    )
    return pl.pallas_call(
        functools.partial(_matmul_bias_kernel, k_axis=2),
        out_shape=jax.ShapeDtypeStruct((M, N), out_dtype),
        grid=(M // tm, N // tn, K // tk),
        in_specs=[
            pl.BlockSpec((tm, tk), lambda i, j, k: (i, k)),
            pl.BlockSpec((tk, tn), lambda i, j, k: (k, j)),
            pl.BlockSpec((1, tn), lambda i, j, k: (0, j)),
        ],
        out_specs=pl.BlockSpec((tm, tn), lambda i, j, k: (i, j)),
        scratch_shapes=[pltpu.VMEM((tm, tn), jnp.float32)],
        compiler_params=pltpu.CompilerParams(
            dimension_semantics=("parallel", "parallel", "arbitrary"),
            vmem_limit_bytes=_VMEM_LIMIT_BYTES,
        ),
        cost_estimate=cost,
    )(x, w, b.reshape(1, N))


def fused_qkv_linear(xs, ws, bs, *, out_dtype=jnp.bfloat16,
                     tm_cap=512, tn_cap=512, tk_cap=512):
    """xs: (3, M, K), ws: (3, K, N), bs: (3, N) -> (3, M, N): xs[p] @ ws[p] + bs[p].

    One pallas_call for all three projections (shared grid / pipelining)."""
    P, M, K = xs.shape
    _, _, N = ws.shape
    align = _sublane_align(xs.dtype)
    tm = _pick_tile(M, tm_cap, align)
    tn = _pick_tile(N, tn_cap, 128)
    tk = _pick_tile(K, tk_cap, 128)
    esx = jnp.dtype(xs.dtype).itemsize
    esw = jnp.dtype(ws.dtype).itemsize
    eso = jnp.dtype(out_dtype).itemsize
    cost = pl.CostEstimate(
        flops=2 * P * M * N * K,
        transcendentals=0,
        bytes_accessed=P * (esx * (N // tn) * M * K
                            + esw * (M // tm) * K * N
                            + eso * M * N + 4 * N),
    )
    return pl.pallas_call(
        functools.partial(_matmul_bias_kernel, k_axis=3),
        out_shape=jax.ShapeDtypeStruct((P, M, N), out_dtype),
        grid=(P, M // tm, N // tn, K // tk),
        in_specs=[
            pl.BlockSpec((None, tm, tk), lambda p, i, j, k: (p, i, k)),
            pl.BlockSpec((None, tk, tn), lambda p, i, j, k: (p, k, j)),
            pl.BlockSpec((None, 1, tn), lambda p, i, j, k: (p, 0, j)),
        ],
        out_specs=pl.BlockSpec((None, tm, tn), lambda p, i, j, k: (p, i, j)),
        scratch_shapes=[pltpu.VMEM((tm, tn), jnp.float32)],
        compiler_params=pltpu.CompilerParams(
            dimension_semantics=("parallel", "parallel", "parallel", "arbitrary"),
            vmem_limit_bytes=_VMEM_LIMIT_BYTES,
        ),
        cost_estimate=cost,
    )(xs, ws, bs.reshape(P, 1, N))


# ---------------------------------------------------------------------------
# Flash attention kernel (online softmax, KV-tiled, head-blocked).
# Grid = (B, head_groups, q_tiles, kv_tiles); KV axis last ("arbitrary").
# q_ref: (tq, Hblk*d_k), k_ref/v_ref: (tkv, Hblk*d_k) — the (B, S, H*d_k)
# layout is indexed directly, so no head-split/concat transposes are needed
# and the output block is lane-dense.
# ---------------------------------------------------------------------------
def _flash_attn_kernel(q_ref, k_ref, v_ref, o_ref, m_ref, l_ref, acc_ref, *,
                       scale, heads, d_k):
    ki = pl.program_id(3)

    @pl.when(ki == 0)
    def _init():
        m_ref[...] = jnp.full(m_ref.shape, -jnp.inf, dtype=m_ref.dtype)
        l_ref[...] = jnp.zeros_like(l_ref)
        acc_ref[...] = jnp.zeros_like(acc_ref)

    for h in range(heads):                      # static unroll over the head group
        cols = slice(h * d_k, (h + 1) * d_k)
        hcol = slice(h, h + 1)

        # Scale q (tq*d_k multiplies) instead of the (tq, tkv) score tile.
        q = q_ref[:, cols] * scale
        k = k_ref[:, cols]
        v = v_ref[:, cols]

        # scores = q @ k^T : contract last dims directly (no explicit k transpose).
        s = lax.dot_general(
            q, k, (((1,), (1,)), ((), ())), preferred_element_type=jnp.float32
        )                                                        # (tq, tkv) f32

        m_prev = m_ref[:, hcol]                                  # (tq, 1)
        m_new = jnp.maximum(m_prev, jnp.max(s, axis=-1, keepdims=True))
        alpha = jnp.exp(m_prev - m_new)
        p = jnp.exp(s - m_new)                                   # (tq, tkv) f32

        l_ref[:, hcol] = alpha * l_ref[:, hcol] + jnp.sum(p, axis=-1, keepdims=True)
        acc_ref[:, cols] = alpha * acc_ref[:, cols] + jnp.dot(
            p.astype(v.dtype), v, preferred_element_type=jnp.float32
        )
        m_ref[:, hcol] = m_new

    @pl.when(ki == pl.num_programs(3) - 1)
    def _store():
        for h in range(heads):
            cols = slice(h * d_k, (h + 1) * d_k)
            # Exact division: runs once per q tile, negligible cost, full precision.
            o_ref[:, cols] = (acc_ref[:, cols] / l_ref[:, h:h + 1]).astype(o_ref.dtype)


def flash_mha(qkv, batch, seq, num_heads, d_k, *, tq_cap=256, tkv_cap=256):
    """qkv: (3, B, S, H*d_k) stacked Q/K/V projections.

    Returns softmax(q k^T / sqrt(d_k)) v in concat-head layout (B, S, H*d_k).
    Note: on v5e (128x128 MXU) tkv_cap=128 can be preferable; 256 is sized for
    the 256-wide MXU on v6e/v7x."""
    P, B, S, D = qkv.shape
    assert (P, B, S, D) == (3, batch, seq, num_heads * d_k)
    dtype = qkv.dtype
    align = _sublane_align(dtype)
    tq = _pick_tile(S, tq_cap, align)
    tkv = _pick_tile(S, tkv_cap, align)
    hblk = _pick_head_block(num_heads, d_k)
    dblk = hblk * d_k
    n_hg = num_heads // hblk
    scale = 1.0 / math.sqrt(d_k)
    esize = jnp.dtype(dtype).itemsize
    cost = pl.CostEstimate(
        flops=4 * B * num_heads * S * S * d_k,
        transcendentals=B * num_heads * S * S,
        bytes_accessed=esize * (B * S * D                  # Q read once
                                + 2 * (S // tq) * B * S * D  # K,V re-streamed per q tile
                                + B * S * D),               # output
    )
    kernel = functools.partial(_flash_attn_kernel, scale=scale, heads=hblk, d_k=d_k)
    # For v7x megacore sharding the leading "parallel" axes (B, head groups,
    # q tiles) should have combined extent >= 2; true here and in practice.
    return pl.pallas_call(
        kernel,
        out_shape=jax.ShapeDtypeStruct((B, S, D), dtype),
        grid=(B, n_hg, S // tq, S // tkv),
        in_specs=[
            pl.BlockSpec((None, None, tq, dblk), lambda b, hg, qi, ki: (0, b, qi, hg)),
            pl.BlockSpec((None, None, tkv, dblk), lambda b, hg, qi, ki: (1, b, ki, hg)),
            pl.BlockSpec((None, None, tkv, dblk), lambda b, hg, qi, ki: (2, b, ki, hg)),
        ],
        out_specs=pl.BlockSpec((None, tq, dblk), lambda b, hg, qi, ki: (b, qi, hg)),
        scratch_shapes=[
            pltpu.VMEM((tq, hblk), jnp.float32),   # running max m (per head column)
            pltpu.VMEM((tq, hblk), jnp.float32),   # running sum l
            pltpu.VMEM((tq, dblk), jnp.float32),   # f32 output accumulator
        ],
        compiler_params=pltpu.CompilerParams(
            dimension_semantics=("parallel", "parallel", "parallel", "arbitrary"),
            vmem_limit_bytes=_VMEM_LIMIT_BYTES,
        ),
        cost_estimate=cost,
    )(qkv, qkv, qkv)


# ---------------------------------------------------------------------------
# Full module forward (mask=None, dropout=None path of the PyTorch module).
# ---------------------------------------------------------------------------
def prepare_params(params, compute_dtype=jnp.bfloat16):
    """Hoisted, done once: stack + cast projection weights; biases stay f32."""
    cd = compute_dtype
    return {
        "w_qkv": jnp.stack([params["wq"], params["wk"], params["wv"]]).astype(cd),
        "b_qkv": jnp.stack([params["bq"], params["bk"], params["bv"]]),
        "wo": params["wo"].astype(cd),
        "bo": params["bo"],
    }


@functools.partial(jax.jit, static_argnames=("num_heads", "compute_dtype"))
def flash_attention_forward(q, k, v, prepared, *, num_heads,
                            compute_dtype=jnp.bfloat16):
    B, S, D = q.shape
    d_k = D // num_heads
    cd = compute_dtype

    # Fused Q/K/V projections (one pallas_call over stacked inputs/weights).
    xs = jnp.stack(
        [q.reshape(B * S, D), k.reshape(B * S, D), v.reshape(B * S, D)]
    ).astype(cd)
    qkv = fused_qkv_linear(xs, prepared["w_qkv"], prepared["b_qkv"], out_dtype=cd)

    # Free reshape only — NO head-split transpose.  The attention kernel reads
    # the (B, S, H*d_k) layout directly and writes the concat-head layout that
    # the output projection consumes (no head-concat transpose either).
    attn = flash_mha(qkv.reshape(3, B, S, D), B, S, num_heads, d_k)   # (B, S, D)

    out = linear(attn.reshape(B * S, D), prepared["wo"], prepared["bo"],
                 out_dtype=jnp.float32)
    return out.reshape(B, S, D)


# ---------------------------------------------------------------------------
# Parameters + pure-JAX reference
# ---------------------------------------------------------------------------
def init_params(key, d_model):
    """Deterministic synthetic parameters. Weights stored (D_in, D_out)."""
    keys = jax.random.split(key, 8)
    s = 1.0 / math.sqrt(d_model)
    p = {}
    for i, n in enumerate(["q", "k", "v", "o"]):
        p[f"w{n}"] = jax.random.uniform(
            keys[2 * i], (d_model, d_model), jnp.float32, -s, s
        )
        p[f"b{n}"] = jax.random.uniform(
            keys[2 * i + 1], (d_model,), jnp.float32, -s, s
        )
    return p


def reference_forward(q, k, v, params, num_heads):
    """Pure-JAX reference mirroring the PyTorch module."""
    B, S, D = q.shape
    d_k = D // num_heads

    def proj(x, w, b):
        y = x.reshape(B * S, D) @ w + b
        return jnp.transpose(y.reshape(B, S, num_heads, d_k), (0, 2, 1, 3))

    qp = proj(q, params["wq"], params["bq"])
    kp = proj(k, params["wk"], params["bk"])
    vp = proj(v, params["wv"], params["bv"])
    s = jnp.einsum("bhqd,bhkd->bhqk", qp, kp) / math.sqrt(d_k)
    p = jax.nn.softmax(s, axis=-1)
    o = jnp.einsum("bhqk,bhkd->bhqd", p, vp)
    concat = jnp.transpose(o, (0, 2, 1, 3)).reshape(B * S, D)
    return (concat @ params["wo"] + params["bo"]).reshape(B, S, D)


if __name__ == "__main__":
    B, S, D, H = 2, 8, 32, 4

    key = jax.random.PRNGKey(0)
    key_q, key_k, key_v, key_p = jax.random.split(key, 4)
    q = jax.random.normal(key_q, (B, S, D), jnp.float32)
    k = jax.random.normal(key_k, (B, S, D), jnp.float32)
    v = jax.random.normal(key_v, (B, S, D), jnp.float32)
    params = init_params(key_p, D)
    ref = reference_forward(q, k, v, params, H)

    # f32 path (tight check).
    out_f32 = flash_attention_forward(
        q, k, v, prepare_params(params, jnp.float32),
        num_heads=H, compute_dtype=jnp.float32)
    out_f32 = jax.block_until_ready(out_f32)
    assert out_f32.shape == (B, S, D)
    assert jnp.allclose(out_f32, ref, atol=1e-2, rtol=1e-2), "f32 mismatch vs reference"

    # bf16 production path (bf16 inter-kernel activations, f32 accumulation).
    out_bf16 = flash_attention_forward(
        q, k, v, prepare_params(params, jnp.bfloat16),
        num_heads=H, compute_dtype=jnp.bfloat16)
    out_bf16 = jax.block_until_ready(out_bf16)
    assert out_bf16.shape == (B, S, D)
    assert jnp.allclose(out_bf16.astype(jnp.float32), ref, atol=1.5e-1, rtol=1.5e-1), \
        "bf16 mismatch vs reference"

    print("KERNEL_OK")
</pallas_src>

<mosaic_0001>
module attributes {stable_mosaic.version = 11 : i64} {
  func.func @_matmul_bias_kernel(%arg0: i32, %arg1: i32, %arg2: i32, %arg3: i32, %arg4: memref<1x16x32xf32, #tpu.memory_space<vmem>>, %arg5: memref<1x32x32xf32, #tpu.memory_space<vmem>>, %arg6: memref<1x1x32xf32, #tpu.memory_space<vmem>>, %arg7: memref<1x16x32xf32, #tpu.memory_space<vmem>>, %arg8: memref<16x32xf32, #tpu.memory_space<vmem>>) attributes {dimension_semantics = [#tpu.dimension_semantics<parallel>, #tpu.dimension_semantics<parallel>, #tpu.dimension_semantics<parallel>, #tpu.dimension_semantics<arbitrary>], iteration_bounds = array<i64: 3, 1, 1, 1>, scalar_prefetch = 0 : i64, scratch_operands = 1 : i64, tpu.core_type = #tpu.core_type<tc>, window_params = [{transform_indices = @transform_0, window_bounds = array<i64: 1, 16, 32>}, {transform_indices = @transform_1, window_bounds = array<i64: 1, 32, 32>}, {transform_indices = @transform_2, window_bounds = array<i64: 1, 1, 32>}, {transform_indices = @transform_3, window_bounds = array<i64: 1, 16, 32>}]} {
    %c0_i32 = arith.constant 0 : i32
    %0 = arith.cmpi eq, %arg3, %c0_i32 : i32
    %1 = arith.extui %0 : i1 to i32
    %c0_i32_0 = arith.constant 0 : i32
    %2 = arith.cmpi ne, %1, %c0_i32_0 : i32
    scf.if %2 {
      %cst_12 = arith.constant 0.000000e+00 : f32
      %14 = vector.broadcast %cst_12 : f32 to vector<16x32xf32>
      %c0_13 = arith.constant 0 : index
      %c0_14 = arith.constant 0 : index
      %15 = vector.load %arg8[%c0_13, %c0_14] : memref<16x32xf32, #tpu.memory_space<vmem>>, vector<16x32xf32>
      tpu.vector_store %arg8[%c0_13, %c0_14], %14 {strides = array<i32>} : memref<16x32xf32, #tpu.memory_space<vmem>>, vector<16x32xf32>,
    } else {
    }
    %c0 = arith.constant 0 : index
    %c0_1 = arith.constant 0 : index
    %3 = vector.load %arg8[%c0, %c0_1] : memref<16x32xf32, #tpu.memory_space<vmem>>, vector<16x32xf32>
    %c0_2 = arith.constant 0 : index
    %c0_3 = arith.constant 0 : index
    %c0_4 = arith.constant 0 : index
    %4 = vector.load %arg4[%c0_2, %c0_3, %c0_4] : memref<1x16x32xf32, #tpu.memory_space<vmem>>, vector<1x16x32xf32>
    %5 = vector.shape_cast %4 : vector<1x16x32xf32> to vector<16x32xf32>
    %c0_5 = arith.constant 0 : index
    %c0_6 = arith.constant 0 : index
    %c0_7 = arith.constant 0 : index
    %6 = vector.load %arg5[%c0_5, %c0_6, %c0_7] : memref<1x32x32xf32, #tpu.memory_space<vmem>>, vector<1x32x32xf32>
    %7 = vector.shape_cast %6 : vector<1x32x32xf32> to vector<32x32xf32>
    %cst = arith.constant dense<0.000000e+00> : vector<16x32xf32>
    %8 = tpu.matmul %5, %7, %cst {dimension_numbers = #tpu.dot_dimension_numbers<[1], [0], [0], [1], [0, 0, 1, 1], [], []>} : vector<16x32xf32>, vector<32x32xf32>, vector<16x32xf32> -> vector<16x32xf32>
    %9 = arith.addf %3, %8 : vector<16x32xf32>
    %c0_8 = arith.constant 0 : index
    %c0_9 = arith.constant 0 : index
    %10 = vector.load %arg8[%c0_8, %c0_9] : memref<16x32xf32, #tpu.memory_space<vmem>>, vector<16x32xf32>
    tpu.vector_store %arg8[%c0_8, %c0_9], %9 {strides = array<i32>} : memref<16x32xf32, #tpu.memory_space<vmem>>, vector<16x32xf32>,
    %c0_i32_10 = arith.constant 0 : i32
    %11 = arith.cmpi eq, %arg3, %c0_i32_10 : i32
    %12 = arith.extui %11 : i1 to i32
    %c0_i32_11 = arith.constant 0 : i32
    %13 = arith.cmpi ne, %12, %c0_i32_11 : i32
    scf.if %13 {
      %c0_12 = arith.constant 0 : index
      %c0_13 = arith.constant 0 : index
      %14 = vector.load %arg8[%c0_12, %c0_13] : memref<16x32xf32, #tpu.memory_space<vmem>>, vector<16x32xf32>
      %c0_14 = arith.constant 0 : index
      %c0_15 = arith.constant 0 : index
      %c0_16 = arith.constant 0 : index
      %15 = vector.load %arg6[%c0_14, %c0_15, %c0_16] : memref<1x1x32xf32, #tpu.memory_space<vmem>>, vector<1x1x32xf32>
      %16 = vector.shape_cast %15 : vector<1x1x32xf32> to vector<1x32xf32>
      %17 = vector.broadcast %16 : vector<1x32xf32> to vector<16x32xf32>
      %18 = arith.addf %14, %17 : vector<16x32xf32>
      %c0_17 = arith.constant 0 : index
      %c0_18 = arith.constant 0 : index
      %c0_19 = arith.constant 0 : index
      %19 = vector.load %arg7[%c0_17, %c0_18, %c0_19] : memref<1x16x32xf32, #tpu.memory_space<vmem>>, vector<1x16x32xf32>
      %20 = vector.shape_cast %19 : vector<1x16x32xf32> to vector<16x32xf32>
      %21 = vector.shape_cast %18 : vector<16x32xf32> to vector<1x16x32xf32>
      tpu.vector_store %arg7[%c0_17, %c0_18, %c0_19], %21 {strides = array<i32>} : memref<1x16x32xf32, #tpu.memory_space<vmem>>, vector<1x16x32xf32>,
    } else {
    }
    return
  }
  func.func @transform_0(%arg0: i32, %arg1: i32, %arg2: i32, %arg3: i32) -> (i32, i32, i32) {
    %c0_i32 = arith.constant 0 : i32
    return %arg0, %arg1, %arg3 : i32, i32, i32
  }
  func.func @transform_1(%arg0: i32, %arg1: i32, %arg2: i32, %arg3: i32) -> (i32, i32, i32) {
    %c0_i32 = arith.constant 0 : i32
    return %arg0, %arg3, %arg2 : i32, i32, i32
  }
  func.func @transform_2(%arg0: i32, %arg1: i32, %arg2: i32, %arg3: i32) -> (i32, i32, i32) {
    %c0_i32 = arith.constant 0 : i32
    %c0_i32_0 = arith.constant 0 : i32
    return %arg0, %c0_i32, %arg2 : i32, i32, i32
  }
  func.func @transform_3(%arg0: i32, %arg1: i32, %arg2: i32, %arg3: i32) -> (i32, i32, i32) {
    %c0_i32 = arith.constant 0 : i32
    return %arg0, %arg1, %arg2 : i32, i32, i32
  }
}

module attributes {stable_mosaic.version = 11 : i64} {
  func.func @_flash_attn_kernel(%arg0: i32, %arg1: i32, %arg2: i32, %arg3: i32, %arg4: memref<1x1x8x32xf32, #tpu.memory_space<vmem>>, %arg5: memref<1x1x8x32xf32, #tpu.memory_space<vmem>>, %arg6: memref<1x1x8x32xf32, #tpu.memory_space<vmem>>, %arg7: memref<1x8x32xf32, #tpu.memory_space<vmem>>, %arg8: memref<8x4xf32, #tpu.memory_space<vmem>>, %arg9: memref<8x4xf32, #tpu.memory_space<vmem>>, %arg10: memref<8x32xf32, #tpu.memory_space<vmem>>) attributes {dimension_semantics = [#tpu.dimension_semantics<parallel>, #tpu.dimension_semantics<parallel>, #tpu.dimension_semantics<parallel>, #tpu.dimension_semantics<arbitrary>], iteration_bounds = array<i64: 2, 1, 1, 1>, scalar_prefetch = 0 : i64, scratch_operands = 3 : i64, tpu.core_type = #tpu.core_type<tc>, window_params = [{transform_indices = @transform_0, window_bounds = array<i64: 1, 1, 8, 32>}, {transform_indices = @transform_1, window_bounds = array<i64: 1, 1, 8, 32>}, {transform_indices = @transform_2, window_bounds = array<i64: 1, 1, 8, 32>}, {transform_indices = @transform_3, window_bounds = array<i64: 1, 8, 32>}]} {
    %c0_i32 = arith.constant 0 : i32
    %0 = arith.cmpi eq, %arg3, %c0_i32 : i32
    %1 = arith.extui %0 : i1 to i32
    %c0_i32_0 = arith.constant 0 : i32
    %2 = arith.cmpi ne, %1, %c0_i32_0 : i32
    scf.if %2 {
      %cst_111 = arith.constant 0xFF800000 : f32
      %130 = vector.broadcast %cst_111 : f32 to vector<8x4xf32>
      %c0_112 = arith.constant 0 : index
      %c0_113 = arith.constant 0 : index
      %131 = vector.load %arg8[%c0_112, %c0_113] : memref<8x4xf32, #tpu.memory_space<vmem>>, vector<8x4xf32>
      tpu.vector_store %arg8[%c0_112, %c0_113], %130 {strides = array<i32>} : memref<8x4xf32, #tpu.memory_space<vmem>>, vector<8x4xf32>,
      %cst_114 = arith.constant 0.000000e+00 : f32
      %132 = vector.broadcast %cst_114 : f32 to vector<8x4xf32>
      %c0_115 = arith.constant 0 : index
      %c0_116 = arith.constant 0 : index
      %133 = vector.load %arg9[%c0_115, %c0_116] : memref<8x4xf32, #tpu.memory_space<vmem>>, vector<8x4xf32>
      tpu.vector_store %arg9[%c0_115, %c0_116], %132 {strides = array<i32>} : memref<8x4xf32, #tpu.memory_space<vmem>>, vector<8x4xf32>,
      %cst_117 = arith.constant 0.000000e+00 : f32
      %134 = vector.broadcast %cst_117 : f32 to vector<8x32xf32>
      %c0_118 = arith.constant 0 : index
      %c0_119 = arith.constant 0 : index
      %135 = vector.load %arg10[%c0_118, %c0_119] : memref<8x32xf32, #tpu.memory_space<vmem>>, vector<8x32xf32>
      tpu.vector_store %arg10[%c0_118, %c0_119], %134 {strides = array<i32>} : memref<8x32xf32, #tpu.memory_space<vmem>>, vector<8x32xf32>,
    } else {
    }
    %c0 = arith.constant 0 : index
    %c0_1 = arith.constant 0 : index
    %c0_2 = arith.constant 0 : index
    %c0_3 = arith.constant 0 : index
    %3 = vector.load %arg4[%c0, %c0_1, %c0_2, %c0_3] : memref<1x1x8x32xf32, #tpu.memory_space<vmem>>, vector<1x1x8x8xf32>
    %4 = vector.shape_cast %3 : vector<1x1x8x8xf32> to vector<8x8xf32>
    %cst = arith.constant 0.353553385 : f32
    %5 = vector.broadcast %cst : f32 to vector<8x8xf32>
    %6 = arith.mulf %4, %5 : vector<8x8xf32>
    %c0_4 = arith.constant 0 : index
    %c0_5 = arith.constant 0 : index
    %c0_6 = arith.constant 0 : index
    %c0_7 = arith.constant 0 : index
    %7 = vector.load %arg5[%c0_4, %c0_5, %c0_6, %c0_7] : memref<1x1x8x32xf32, #tpu.memory_space<vmem>>, vector<1x1x8x8xf32>
    %8 = vector.shape_cast %7 : vector<1x1x8x8xf32> to vector<8x8xf32>
    %c0_8 = arith.constant 0 : index
    %c0_9 = arith.constant 0 : index
    %c0_10 = arith.constant 0 : index
    %c0_11 = arith.constant 0 : index
    %9 = vector.load %arg6[%c0_8, %c0_9, %c0_10, %c0_11] : memref<1x1x8x32xf32, #tpu.memory_space<vmem>>, vector<1x1x8x8xf32>
    %10 = vector.shape_cast %9 : vector<1x1x8x8xf32> to vector<8x8xf32>
    %cst_12 = arith.constant dense<0.000000e+00> : vector<8x8xf32>
    %11 = tpu.matmul %6, %8, %cst_12 {dimension_numbers = #tpu.dot_dimension_numbers<[1], [1], [0], [0], [0, 0, 1, 0], [], []>} : vector<8x8xf32>, vector<8x8xf32>, vector<8x8xf32> -> vector<8x8xf32>
    %c0_13 = arith.constant 0 : index
    %c0_14 = arith.constant 0 : index
    %12 = vector.load %arg8[%c0_13, %c0_14] : memref<8x4xf32, #tpu.memory_space<vmem>>, vector<8x1xf32>
    %cst_15 = arith.constant dense<0xFF800000> : vector<8xf32>
    %13 = vector.multi_reduction <maximumf>, %11, %cst_15 [1] : vector<8x8xf32> to vector<8xf32>
    %14 = vector.shape_cast %13 : vector<8xf32> to vector<8x1xf32>
    %15 = arith.maximumf %12, %14 : vector<8x1xf32>
    %16 = arith.subf %12, %15 : vector<8x1xf32>
    %17 = math.exp %16 : vector<8x1xf32>
    %18 = vector.broadcast %15 : vector<8x1xf32> to vector<8x8xf32>
    %19 = arith.subf %11, %18 : vector<8x8xf32>
    %20 = math.exp %19 : vector<8x8xf32>
    %c0_16 = arith.constant 0 : index
    %c0_17 = arith.constant 0 : index
    %21 = vector.load %arg9[%c0_16, %c0_17] : memref<8x4xf32, #tpu.memory_space<vmem>>, vector<8x1xf32>
    %22 = arith.mulf %17, %21 : vector<8x1xf32>
    %cst_18 = arith.constant dense<0.000000e+00> : vector<8xf32>
    %23 = vector.multi_reduction <add>, %20, %cst_18 [1] : vector<8x8xf32> to vector<8xf32>
    %24 = vector.shape_cast %23 : vector<8xf32> to vector<8x1xf32>
    %25 = arith.addf %22, %24 : vector<8x1xf32>
    %c0_19 = arith.constant 0 : index
    %c0_20 = arith.constant 0 : index
    %26 = vector.load %arg9[%c0_19, %c0_20] : memref<8x4xf32, #tpu.memory_space<vmem>>, vector<8x1xf32>
    tpu.vector_store %arg9[%c0_19, %c0_20], %25 {strides = array<i32>} : memref<8x4xf32, #tpu.memory_space<vmem>>, vector<8x1xf32>,
    %c0_21 = arith.constant 0 : index
    %c0_22 = arith.constant 0 : index
    %27 = vector.load %arg10[%c0_21, %c0_22] : memref<8x32xf32, #tpu.memory_space<vmem>>, vector<8x8xf32>
    %28 = vector.broadcast %17 : vector<8x1xf32> to vector<8x8xf32>
    %29 = arith.mulf %28, %27 : vector<8x8xf32>
    %cst_23 = arith.constant dense<0.000000e+00> : vector<8x8xf32>
    %30 = tpu.matmul %20, %10, %cst_23 {dimension_numbers = #tpu.dot_dimension_numbers<[1], [0], [0], [1], [0, 0, 1, 1], [], []>} : vector<8x8xf32>, vector<8x8xf32>, vector<8x8xf32> -> vector<8x8xf32>
    %31 = arith.addf %29, %30 : vector<8x8xf32>
    %c0_24 = arith.constant 0 : index
    %c0_25 = arith.constant 0 : index
    %32 = vector.load %arg10[%c0_24, %c0_25] : memref<8x32xf32, #tpu.memory_space<vmem>>, vector<8x8xf32>
    tpu.vector_store %arg10[%c0_24, %c0_25], %31 {strides = array<i32>} : memref<8x32xf32, #tpu.memory_space<vmem>>, vector<8x8xf32>,
    %c0_26 = arith.constant 0 : index
    %c0_27 = arith.constant 0 : index
    %33 = vector.load %arg8[%c0_26, %c0_27] : memref<8x4xf32, #tpu.memory_space<vmem>>, vector<8x1xf32>
    tpu.vector_store %arg8[%c0_26, %c0_27], %15 {strides = array<i32>} : memref<8x4xf32, #tpu.memory_space<vmem>>, vector<8x1xf32>,
    %c0_28 = arith.constant 0 : index
    %c0_29 = arith.constant 0 : index
    %c0_30 = arith.constant 0 : index
    %c8 = arith.constant 8 : index
    %34 = vector.load %arg4[%c0_28, %c0_29, %c0_30, %c8] : memref<1x1x8x32xf32, #tpu.memory_space<vmem>>, vector<1x1x8x8xf32>
    %35 = vector.shape_cast %34 : vector<1x1x8x8xf32> to vector<8x8xf32>
    %cst_31 = arith.constant 0.353553385 : f32
    %36 = vector.broadcast %cst_31 : f32 to vector<8x8xf32>
    %37 = arith.mulf %35, %36 : vector<8x8xf32>
    %c0_32 = arith.constant 0 : index
    %c0_33 = arith.constant 0 : index
    %c0_34 = arith.constant 0 : index
    %c8_35 = arith.constant 8 : index
    %38 = vector.load %arg5[%c0_32, %c0_33, %c0_34, %c8_35] : memref<1x1x8x32xf32, #tpu.memory_space<vmem>>, vector<1x1x8x8xf32>
    %39 = vector.shape_cast %38 : vector<1x1x8x8xf32> to vector<8x8xf32>
    %c0_36 = arith.constant 0 : index
    %c0_37 = arith.constant 0 : index
    %c0_38 = arith.constant 0 : index
    %c8_39 = arith.constant 8 : index
    %40 = vector.load %arg6[%c0_36, %c0_37, %c0_38, %c8_39] : memref<1x1x8x32xf32, #tpu.memory_space<vmem>>, vector<1x1x8x8xf32>
    %41 = vector.shape_cast %40 : vector<1x1x8x8xf32> to vector<8x8xf32>
    %cst_40 = arith.constant dense<0.000000e+00> : vector<8x8xf32>
    %42 = tpu.matmul %37, %39, %cst_40 {dimension_numbers = #tpu.dot_dimension_numbers<[1], [1], [0], [0], [0, 0, 1, 0], [], []>} : vector<8x8xf32>, vector<8x8xf32>, vector<8x8xf32> -> vector<8x8xf32>
    %c0_41 = arith.constant 0 : index
    %c1 = arith.constant 1 : index
    %43 = vector.load %arg8[%c0_41, %c1] : memref<8x4xf32, #tpu.memory_space<vmem>>, vector<8x1xf32>
    %cst_42 = arith.constant dense<0xFF800000> : vector<8xf32>
    %44 = vector.multi_reduction <maximumf>, %42, %cst_42 [1] : vector<8x8xf32> to vector<8xf32>
    %45 = vector.shape_cast %44 : vector<8xf32> to vector<8x1xf32>
    %46 = arith.maximumf %43, %45 : vector<8x1xf32>
    %47 = arith.subf %43, %46 : vector<8x1xf32>
    %48 = math.exp %47 : vector<8x1xf32>
    %49 = vector.broadcast %46 : vector<8x1xf32> to vector<8x8xf32>
    %50 = arith.subf %42, %49 : vector<8x8xf32>
    %51 = math.exp %50 : vector<8x8xf32>
    %c0_43 = arith.constant 0 : index
    %c1_44 = arith.constant 1 : index
    %52 = vector.load %arg9[%c0_43, %c1_44] : memref<8x4xf32, #tpu.memory_space<vmem>>, vector<8x1xf32>
    %53 = arith.mulf %48, %52 : vector<8x1xf32>
    %cst_45 = arith.constant dense<0.000000e+00> : vector<8xf32>
    %54 = vector.multi_reduction <add>, %51, %cst_45 [1] : vector<8x8xf32> to vector<8xf32>
    %55 = vector.shape_cast %54 : vector<8xf32> to vector<8x1xf32>
    %56 = arith.addf %53, %55 : vector<8x1xf32>
    %c0_46 = arith.constant 0 : index
    %c1_47 = arith.constant 1 : index
    %57 = vector.load %arg9[%c0_46, %c1_47] : memref<8x4xf32, #tpu.memory_space<vmem>>, vector<8x1xf32>
    tpu.vector_store %arg9[%c0_46, %c1_47], %56 {strides = array<i32>} : memref<8x4xf32, #tpu.memory_space<vmem>>, vector<8x1xf32>,
    %c0_48 = arith.constant 0 : index
    %c8_49 = arith.constant 8 : index
    %58 = vector.load %arg10[%c0_48, %c8_49] : memref<8x32xf32, #tpu.memory_space<vmem>>, vector<8x8xf32>
    %59 = vector.broadcast %48 : vector<8x1xf32> to vector<8x8xf32>
    %60 = arith.mulf %59, %58 : vector<8x8xf32>
    %cst_50 = arith.constant dense<0.000000e+00> : vector<8x8xf32>
    %61 = tpu.matmul %51, %41, %cst_50 {dimension_numbers = #tpu.dot_dimension_numbers<[1], [0], [0], [1], [0, 0, 1, 1], [], []>} : vector<8x8xf32>, vector<8x8xf32>, vector<8x8xf32> -> vector<8x8xf32>
    %62 = arith.addf %60, %61 : vector<8x8xf32>
    %c0_51 = arith.constant 0 : index
    %c8_52 = arith.constant 8 : index
    %63 = vector.load %arg10[%c0_51, %c8_52] : memref<8x32xf32, #tpu.memory_space<vmem>>, vector<8x8xf32>
    tpu.vector_store %arg10[%c0_51, %c8_52], %62 {strides = array<i32>} : memref<8x32xf32, #tpu.memory_space<vmem>>, vector<8x8xf32>,
    %c0_53 = arith.constant 0 : index
    %c1_54 = arith.constant 1 : index
    %64 = vector.load %arg8[%c0_53, %c1_54] : memref<8x4xf32, #tpu.memory_space<vmem>>, vector<8x1xf32>
    tpu.vector_store %arg8[%c0_53, %c1_54], %46 {strides = array<i32>} : memref<8x4xf32, #tpu.memory_space<vmem>>, vector<8x1xf32>,
    %c0_55 = arith.constant 0 : index
    %c0_56 = arith.constant 0 : index
    %c0_57 = arith.constant 0 : index
    %c16 = arith.constant 16 : index
    %65 = vector.load %arg4[%c0_55, %c0_56, %c0_57, %c16] : memref<1x1x8x32xf32, #tpu.memory_space<vmem>>, vector<1x1x8x8xf32>
    %66 = vector.shape_cast %65 : vector<1x1x8x8xf32> to vector<8x8xf32>
    %cst_58 = arith.constant 0.353553385 : f32
    %67 = vector.broadcast %cst_58 : f32 to vector<8x8xf32>
    %68 = arith.mulf %66, %67 : vector<8x8xf32>
    %c0_59 = arith.constant 0 : index
    %c0_60 = arith.constant 0 : index
    %c0_61 = arith.constant 0 : index
    %c16_62 = arith.constant 16 : index
    %69 = vector.load %arg5[%c0_59, %c0_60, %c0_61, %c16_62] : memref<1x1x8x32xf32, #tpu.memory_space<vmem>>, vector<1x1x8x8xf32>
    %70 = vector.shape_cast %69 : vector<1x1x8x8xf32> to vector<8x8xf32>
    %c0_63 = arith.constant 0 : index
    %c0_64 = arith.constant 0 : index
    %c0_65 = arith.constant 0 : index
    %c16_66 = arith.constant 16 : index
    %71 = vector.load %arg6[%c0_63, %c0_64, %c0_65, %c16_66] : memref<1x1x8x32xf32, #tpu.memory_space<vmem>>, vector<1x1x8x8xf32>
    %72 = vector.shape_cast %71 : vector<1x1x8x8xf32> to vector<8x8xf32>
    %cst_67 = arith.constant dense<0.000000e+00> : vector<8x8xf32>
    %73 = tpu.matmul %68, %70, %cst_67 {dimension_numbers = #tpu.dot_dimension_numbers<[1], [1], [0], [0], [0, 0, 1, 0], [], []>} : vector<8x8xf32>, vector<8x8xf32>, vector<8x8xf32> -> vector<8x8xf32>
    %c0_68 = arith.constant 0 : index
    %c2 = arith.constant 2 : index
    %74 = vector.load %arg8[%c0_68, %c2] : memref<8x4xf32, #tpu.memory_space<vmem>>, vector<8x1xf32>
    %cst_69 = arith.constant dense<0xFF800000> : vector<8xf32>
    %75 = vector.multi_reduction <maximumf>, %73, %cst_69 [1] : vector<8x8xf32> to vector<8xf32>
    %76 = vector.shape_cast %75 : vector<8xf32> to vector<8x1xf32>
    %77 = arith.maximumf %74, %76 : vector<8x1xf32>
    %78 = arith.subf %74, %77 : vector<8x1xf32>
    %79 = math.exp %78 : vector<8x1xf32>
    %80 = vector.broadcast %77 : vector<8x1xf32> to vector<8x8xf32>
    %81 = arith.subf %73, %80 : vector<8x8xf32>
    %82 = math.exp %81 : vector<8x8xf32>
    %c0_70 = arith.constant 0 : index
    %c2_71 = arith.constant 2 : index
    %83 = vector.load %arg9[%c0_70, %c2_71] : memref<8x4xf32, #tpu.memory_space<vmem>>, vector<8x1xf32>
    %84 = arith.mulf %79, %83 : vector<8x1xf32>
    %cst_72 = arith.constant dense<0.000000e+00> : vector<8xf32>
    %85 = vector.multi_reduction <add>, %82, %cst_72 [1] : vector<8x8xf32> to vector<8xf32>
    %86 = vector.shape_cast %85 : vector<8xf32> to vector<8x1xf32>
    %87 = arith.addf %84, %86 : vector<8x1xf32>
    %c0_73 = arith.constant 0 : index
    %c2_74 = arith.constant 2 : index
    %88 = vector.load %arg9[%c0_73, %c2_74] : memref<8x4xf32, #tpu.memory_space<vmem>>, vector<8x1xf32>
    tpu.vector_store %arg9[%c0_73, %c2_74], %87 {strides = array<i32>} : memref<8x4xf32, #tpu.memory_space<vmem>>, vector<8x1xf32>,
    %c0_75 = arith.constant 0 : index
    %c16_76 = arith.constant 16 : index
    %89 = vector.load %arg10[%c0_75, %c16_76] : memref<8x32xf32, #tpu.memory_space<vmem>>, vector<8x8xf32>
    %90 = vector.broadcast %79 : vector<8x1xf32> to vector<8x8xf32>
    %91 = arith.mulf %90, %89 : vector<8x8xf32>
    %cst_77 = arith.constant dense<0.000000e+00> : vector<8x8xf32>
    %92 = tpu.matmul %82, %72, %cst_77 {dimension_numbers = #tpu.dot_dimension_numbers<[1], [0], [0], [1], [0, 0, 1, 1], [], []>} : vector<8x8xf32>, vector<8x8xf32>, vector<8x8xf32> -> vector<8x8xf32>
    %93 = arith.addf %91, %92 : vector<8x8xf32>
    %c0_78 = arith.constant 0 : index
    %c16_79 = arith.constant 16 : index
    %94 = vector.load %arg10[%c0_78, %c16_79] : memref<8x32xf32, #tpu.memory_space<vmem>>, vector<8x8xf32>
    tpu.vector_store %arg10[%c0_78, %c16_79], %93 {strides = array<i32>} : memref<8x32xf32, #tpu.memory_space<vmem>>, vector<8x8xf32>,
    %c0_80 = arith.constant 0 : index
    %c2_81 = arith.constant 2 : index
    %95 = vector.load %arg8[%c0_80, %c2_81] : memref<8x4xf32, #tpu.memory_space<vmem>>, vector<8x1xf32>
    tpu.vector_store %arg8[%c0_80, %c2_81], %77 {strides = array<i32>} : memref<8x4xf32, #tpu.memory_space<vmem>>, vector<8x1xf32>,
    %c0_82 = arith.constant 0 : index
    %c0_83 = arith.constant 0 : index
    %c0_84 = arith.constant 0 : index
    %c24 = arith.constant 24 : index
    %96 = vector.load %arg4[%c0_82, %c0_83, %c0_84, %c24] : memref<1x1x8x32xf32, #tpu.memory_space<vmem>>, vector<1x1x8x8xf32>
    %97 = vector.shape_cast %96 : vector<1x1x8x8xf32> to vector<8x8xf32>
    %cst_85 = arith.constant 0.353553385 : f32
    %98 = vector.broadcast %cst_85 : f32 to vector<8x8xf32>
    %99 = arith.mulf %97, %98 : vector<8x8xf32>
    %c0_86 = arith.constant 0 : index
    %c0_87 = arith.constant 0 : index
    %c0_88 = arith.constant 0 : index
    %c24_89 = arith.constant 24 : index
    %100 = vector.load %arg5[%c0_86, %c0_87, %c0_88, %c24_89] : memref<1x1x8x32xf32, #tpu.memory_space<vmem>>, vector<1x1x8x8xf32>
    %101 = vector.shape_cast %100 : vector<1x1x8x8xf32> to vector<8x8xf32>
    %c0_90 = arith.constant 0 : index
    %c0_91 = arith.constant 0 : index
    %c0_92 = arith.constant 0 : index
    %c24_93 = arith.constant 24 : index
    %102 = vector.load %arg6[%c0_90, %c0_91, %c0_92, %c24_93] : memref<1x1x8x32xf32, #tpu.memory_space<vmem>>, vector<1x1x8x8xf32>
    %103 = vector.shape_cast %102 : vector<1x1x8x8xf32> to vector<8x8xf32>
    %cst_94 = arith.constant dense<0.000000e+00> : vector<8x8xf32>
    %104 = tpu.matmul %99, %101, %cst_94 {dimension_numbers = #tpu.dot_dimension_numbers<[1], [1], [0], [0], [0, 0, 1, 0], [], []>} : vector<8x8xf32>, vector<8x8xf32>, vector<8x8xf32> -> vector<8x8xf32>
    %c0_95 = arith.constant 0 : index
    %c3 = arith.constant 3 : index
    %105 = vector.load %arg8[%c0_95, %c3] : memref<8x4xf32, #tpu.memory_space<vmem>>, vector<8x1xf32>
    %cst_96 = arith.constant dense<0xFF800000> : vector<8xf32>
    %106 = vector.multi_reduction <maximumf>, %104, %cst_96 [1] : vector<8x8xf32> to vector<8xf32>
    %107 = vector.shape_cast %106 : vector<8xf32> to vector<8x1xf32>
    %108 = arith.maximumf %105, %107 : vector<8x1xf32>
    %109 = arith.subf %105, %108 : vector<8x1xf32>
    %110 = math.exp %109 : vector<8x1xf32>
    %111 = vector.broadcast %108 : vector<8x1xf32> to vector<8x8xf32>
    %112 = arith.subf %104, %111 : vector<8x8xf32>
    %113 = math.exp %112 : vector<8x8xf32>
    %c0_97 = arith.constant 0 : index
    %c3_98 = arith.constant 3 : index
    %114 = vector.load %arg9[%c0_97, %c3_98] : memref<8x4xf32, #tpu.memory_space<vmem>>, vector<8x1xf32>
    %115 = arith.mulf %110, %114 : vector<8x1xf32>
    %cst_99 = arith.constant dense<0.000000e+00> : vector<8xf32>
    %116 = vector.multi_reduction <add>, %113, %cst_99 [1] : vector<8x8xf32> to vector<8xf32>
    %117 = vector.shape_cast %116 : vector<8xf32> to vector<8x1xf32>
    %118 = arith.addf %115, %117 : vector<8x1xf32>
    %c0_100 = arith.constant 0 : index
    %c3_101 = arith.constant 3 : index
    %119 = vector.load %arg9[%c0_100, %c3_101] : memref<8x4xf32, #tpu.memory_space<vmem>>, vector<8x1xf32>
    tpu.vector_store %arg9[%c0_100, %c3_101], %118 {strides = array<i32>} : memref<8x4xf32, #tpu.memory_space<vmem>>, vector<8x1xf32>,
    %c0_102 = arith.constant 0 : index
    %c24_103 = arith.constant 24 : index
    %120 = vector.load %arg10[%c0_102, %c24_103] : memref<8x32xf32, #tpu.memory_space<vmem>>, vector<8x8xf32>
    %121 = vector.broadcast %110 : vector<8x1xf32> to vector<8x8xf32>
    %122 = arith.mulf %121, %120 : vector<8x8xf32>
    %cst_104 = arith.constant dense<0.000000e+00> : vector<8x8xf32>
    %123 = tpu.matmul %113, %103, %cst_104 {dimension_numbers = #tpu.dot_dimension_numbers<[1], [0], [0], [1], [0, 0, 1, 1], [], []>} : vector<8x8xf32>, vector<8x8xf32>, vector<8x8xf32> -> vector<8x8xf32>
    %124 = arith.addf %122, %123 : vector<8x8xf32>
    %c0_105 = arith.constant 0 : index
    %c24_106 = arith.constant 24 : index
    %125 = vector.load %arg10[%c0_105, %c24_106] : memref<8x32xf32, #tpu.memory_space<vmem>>, vector<8x8xf32>
    tpu.vector_store %arg10[%c0_105, %c24_106], %124 {strides = array<i32>} : memref<8x32xf32, #tpu.memory_space<vmem>>, vector<8x8xf32>,
    %c0_107 = arith.constant 0 : index
    %c3_108 = arith.constant 3 : index
    %126 = vector.load %arg8[%c0_107, %c3_108] : memref<8x4xf32, #tpu.memory_space<vmem>>, vector<8x1xf32>
    tpu.vector_store %arg8[%c0_107, %c3_108], %108 {strides = array<i32>} : memref<8x4xf32, #tpu.memory_space<vmem>>, vector<8x1xf32>,
    %c0_i32_109 = arith.constant 0 : i32
    %127 = arith.cmpi eq, %arg3, %c0_i32_109 : i32
    %128 = arith.extui %127 : i1 to i32
    %c0_i32_110 = arith.constant 0 : i32
    %129 = arith.cmpi ne, %128, %c0_i32_110 : i32
    scf.if %129 {
      %c0_111 = arith.constant 0 : index
      %c0_112 = arith.constant 0 : index
      %130 = vector.load %arg10[%c0_111, %c0_112] : memref<8x32xf32, #tpu.memory_space<vmem>>, vector<8x8xf32>
      %c0_113 = arith.constant 0 : index
      %c0_114 = arith.constant 0 : index
      %131 = vector.load %arg9[%c0_113, %c0_114] : memref<8x4xf32, #tpu.memory_space<vmem>>, vector<8x1xf32>
      %132 = vector.broadcast %131 : vector<8x1xf32> to vector<8x8xf32>
      %133 = arith.divf %130, %132 : vector<8x8xf32>
      %c0_115 = arith.constant 0 : index
      %c0_116 = arith.constant 0 : index
      %c0_117 = arith.constant 0 : index
      %134 = vector.load %arg7[%c0_115, %c0_116, %c0_117] : memref<1x8x32xf32, #tpu.memory_space<vmem>>, vector<1x8x8xf32>
      %135 = vector.shape_cast %134 : vector<1x8x8xf32> to vector<8x8xf32>
      %136 = vector.shape_cast %133 : vector<8x8xf32> to vector<1x8x8xf32>
      tpu.vector_store %arg7[%c0_115, %c0_116, %c0_117], %136 {strides = array<i32>} : memref<1x8x32xf32, #tpu.memory_space<vmem>>, vector<1x8x8xf32>,
      %c0_118 = arith.constant 0 : index
      %c8_119 = arith.constant 8 : index
      %137 = vector.load %arg10[%c0_118, %c8_119] : memref<8x32xf32, #tpu.memory_space<vmem>>, vector<8x8xf32>
      %c0_120 = arith.constant 0 : index
      %c1_121 = arith.constant 1 : index
      %138 = vector.load %arg9[%c0_120, %c1_121] : memref<8x4xf32, #tpu.memory_space<vmem>>, vector<8x1xf32>
      %139 = vector.broadcast %138 : vector<8x1xf32> to vector<8x8xf32>
      %140 = arith.divf %137, %139 : vector<8x8xf32>
      %c0_122 = arith.constant 0 : index
      %c0_123 = arith.constant 0 : index
      %c8_124 = arith.constant 8 : index
      %141 = vector.load %arg7[%c0_122, %c0_123, %c8_124] : memref<1x8x32xf32, #tpu.memory_space<vmem>>, vector<1x8x8xf32>
      %142 = vector.shape_cast %141 : vector<1x8x8xf32> to vector<8x8xf32>
      %143 = vector.shape_cast %140 : vector<8x8xf32> to vector<1x8x8xf32>
      tpu.vector_store %arg7[%c0_122, %c0_123, %c8_124], %143 {strides = array<i32>} : memref<1x8x32xf32, #tpu.memory_space<vmem>>, vector<1x8x8xf32>,
      %c0_125 = arith.constant 0 : index
      %c16_126 = arith.constant 16 : index
      %144 = vector.load %arg10[%c0_125, %c16_126] : memref<8x32xf32, #tpu.memory_space<vmem>>, vector<8x8xf32>
      %c0_127 = arith.constant 0 : index
      %c2_128 = arith.constant 2 : index
      %145 = vector.load %arg9[%c0_127, %c2_128] : memref<8x4xf32, #tpu.memory_space<vmem>>, vector<8x1xf32>
      %146 = vector.broadcast %145 : vector<8x1xf32> to vector<8x8xf32>
      %147 = arith.divf %144, %146 : vector<8x8xf32>
      %c0_129 = arith.constant 0 : index
      %c0_130 = arith.constant 0 : index
      %c16_131 = arith.constant 16 : index
      %148 = vector.load %arg7[%c0_129, %c0_130, %c16_131] : memref<1x8x32xf32, #tpu.memory_space<vmem>>, vector<1x8x8xf32>
      %149 = vector.shape_cast %148 : vector<1x8x8xf32> to vector<8x8xf32>
      %150 = vector.shape_cast %147 : vector<8x8xf32> to vector<1x8x8xf32>
      tpu.vector_store %arg7[%c0_129, %c0_130, %c16_131], %150 {strides = array<i32>} : memref<1x8x32xf32, #tpu.memory_space<vmem>>, vector<1x8x8xf32>,
      %c0_132 = arith.constant 0 : index
      %c24_133 = arith.constant 24 : index
      %151 = vector.load %arg10[%c0_132, %c24_133] : memref<8x32xf32, #tpu.memory_space<vmem>>, vector<8x8xf32>
      %c0_134 = arith.constant 0 : index
      %c3_135 = arith.constant 3 : index
      %152 = vector.load %arg9[%c0_134, %c3_135] : memref<8x4xf32, #tpu.memory_space<vmem>>, vector<8x1xf32>
      %153 = vector.broadcast %152 : vector<8x1xf32> to vector<8x8xf32>
      %154 = arith.divf %151, %153 : vector<8x8xf32>
      %c0_136 = arith.constant 0 : index
      %c0_137 = arith.constant 0 : index
      %c24_138 = arith.constant 24 : index
      %155 = vector.load %arg7[%c0_136, %c0_137, %c24_138] : memref<1x8x32xf32, #tpu.memory_space<vmem>>, vector<1x8x8xf32>
      %156 = vector.shape_cast %155 : vector<1x8x8xf32> to vector<8x8xf32>
      %157 = vector.shape_cast %154 : vector<8x8xf32> to vector<1x8x8xf32>
      tpu.vector_store %arg7[%c0_136, %c0_137, %c24_138], %157 {strides = array<i32>} : memref<1x8x32xf32, #tpu.memory_space<vmem>>, vector<1x8x8xf32>,
    } else {
    }
    return
  }
  func.func @transform_0(%arg0: i32, %arg1: i32, %arg2: i32, %arg3: i32) -> (i32, i32, i32, i32) {
    %c0_i32 = arith.constant 0 : i32
    %c0_i32_0 = arith.constant 0 : i32
    return %c0_i32, %arg0, %arg2, %arg1 : i32, i32, i32, i32
  }
  func.func @transform_1(%arg0: i32, %arg1: i32, %arg2: i32, %arg3: i32) -> (i32, i32, i32, i32) {
    %c1_i32 = arith.constant 1 : i32
    %c0_i32 = arith.constant 0 : i32
    return %c1_i32, %arg0, %arg3, %arg1 : i32, i32, i32, i32
  }
  func.func @transform_2(%arg0: i32, %arg1: i32, %arg2: i32, %arg3: i32) -> (i32, i32, i32, i32) {
    %c2_i32 = arith.constant 2 : i32
    %c0_i32 = arith.constant 0 : i32
    return %c2_i32, %arg0, %arg3, %arg1 : i32, i32, i32, i32
  }
  func.func @transform_3(%arg0: i32, %arg1: i32, %arg2: i32, %arg3: i32) -> (i32, i32, i32) {
    %c0_i32 = arith.constant 0 : i32
    return %arg0, %arg2, %arg1 : i32, i32, i32
  }
}

module attributes {stable_mosaic.version = 11 : i64} {
  func.func @_matmul_bias_kernel(%arg0: i32, %arg1: i32, %arg2: i32, %arg3: memref<16x32xf32, #tpu.memory_space<vmem>>, %arg4: memref<32x32xf32, #tpu.memory_space<vmem>>, %arg5: memref<1x32xf32, #tpu.memory_space<vmem>>, %arg6: memref<16x32xf32, #tpu.memory_space<vmem>>, %arg7: memref<16x32xf32, #tpu.memory_space<vmem>>) attributes {dimension_semantics = [#tpu.dimension_semantics<parallel>, #tpu.dimension_semantics<parallel>, #tpu.dimension_semantics<arbitrary>], iteration_bounds = array<i64: 1, 1, 1>, scalar_prefetch = 0 : i64, scratch_operands = 1 : i64, tpu.core_type = #tpu.core_type<tc>, window_params = [{transform_indices = @transform_0, window_bounds = array<i64: 16, 32>}, {transform_indices = @transform_1, window_bounds = array<i64: 32, 32>}, {transform_indices = @transform_2, window_bounds = array<i64: 1, 32>}, {transform_indices = @transform_3, window_bounds = array<i64: 16, 32>}]} {
    %c0_i32 = arith.constant 0 : i32
    %0 = arith.cmpi eq, %arg2, %c0_i32 : i32
    %1 = arith.extui %0 : i1 to i32
    %c0_i32_0 = arith.constant 0 : i32
    %2 = arith.cmpi ne, %1, %c0_i32_0 : i32
    scf.if %2 {
      %cst_10 = arith.constant 0.000000e+00 : f32
      %12 = vector.broadcast %cst_10 : f32 to vector<16x32xf32>
      %c0_11 = arith.constant 0 : index
      %c0_12 = arith.constant 0 : index
      %13 = vector.load %arg7[%c0_11, %c0_12] : memref<16x32xf32, #tpu.memory_space<vmem>>, vector<16x32xf32>
      tpu.vector_store %arg7[%c0_11, %c0_12], %12 {strides = array<i32>} : memref<16x32xf32, #tpu.memory_space<vmem>>, vector<16x32xf32>,
    } else {
    }
    %c0 = arith.constant 0 : index
    %c0_1 = arith.constant 0 : index
    %3 = vector.load %arg7[%c0, %c0_1] : memref<16x32xf32, #tpu.memory_space<vmem>>, vector<16x32xf32>
    %c0_2 = arith.constant 0 : index
    %c0_3 = arith.constant 0 : index
    %4 = vector.load %arg3[%c0_2, %c0_3] : memref<16x32xf32, #tpu.memory_space<vmem>>, vector<16x32xf32>
    %c0_4 = arith.constant 0 : index
    %c0_5 = arith.constant 0 : index
    %5 = vector.load %arg4[%c0_4, %c0_5] : memref<32x32xf32, #tpu.memory_space<vmem>>, vector<32x32xf32>
    %cst = arith.constant dense<0.000000e+00> : vector<16x32xf32>
    %6 = tpu.matmul %4, %5, %cst {dimension_numbers = #tpu.dot_dimension_numbers<[1], [0], [0], [1], [0, 0, 1, 1], [], []>} : vector<16x32xf32>, vector<32x32xf32>, vector<16x32xf32> -> vector<16x32xf32>
    %7 = arith.addf %3, %6 : vector<16x32xf32>
    %c0_6 = arith.constant 0 : index
    %c0_7 = arith.constant 0 : index
    %8 = vector.load %arg7[%c0_6, %c0_7] : memref<16x32xf32, #tpu.memory_space<vmem>>, vector<16x32xf32>
    tpu.vector_store %arg7[%c0_6, %c0_7], %7 {strides = array<i32>} : memref<16x32xf32, #tpu.memory_space<vmem>>, vector<16x32xf32>,
    %c0_i32_8 = arith.constant 0 : i32
    %9 = arith.cmpi eq, %arg2, %c0_i32_8 : i32
    %10 = arith.extui %9 : i1 to i32
    %c0_i32_9 = arith.constant 0 : i32
    %11 = arith.cmpi ne, %10, %c0_i32_9 : i32
    scf.if %11 {
      %c0_10 = arith.constant 0 : index
      %c0_11 = arith.constant 0 : index
      %12 = vector.load %arg7[%c0_10, %c0_11] : memref<16x32xf32, #tpu.memory_space<vmem>>, vector<16x32xf32>
      %c0_12 = arith.constant 0 : index
      %c0_13 = arith.constant 0 : index
      %13 = vector.load %arg5[%c0_12, %c0_13] : memref<1x32xf32, #tpu.memory_space<vmem>>, vector<1x32xf32>
      %14 = vector.broadcast %13 : vector<1x32xf32> to vector<16x32xf32>
      %15 = arith.addf %12, %14 : vector<16x32xf32>
      %c0_14 = arith.constant 0 : index
      %c0_15 = arith.constant 0 : index
      %16 = vector.load %arg6[%c0_14, %c0_15] : memref<16x32xf32, #tpu.memory_space<vmem>>, vector<16x32xf32>
      tpu.vector_store %arg6[%c0_14, %c0_15], %15 {strides = array<i32>} : memref<16x32xf32, #tpu.memory_space<vmem>>, vector<16x32xf32>,
    } else {
    }
    return
  }
  func.func @transform_0(%arg0: i32, %arg1: i32, %arg2: i32) -> (i32, i32) {
    %c0_i32 = arith.constant 0 : i32
    return %arg0, %arg2 : i32, i32
  }
  func.func @transform_1(%arg0: i32, %arg1: i32, %arg2: i32) -> (i32, i32) {
    %c0_i32 = arith.constant 0 : i32
    return %arg2, %arg1 : i32, i32
  }
  func.func @transform_2(%arg0: i32, %arg1: i32, %arg2: i32) -> (i32, i32) {
    %c0_i32 = arith.constant 0 : i32
    %c0_i32_0 = arith.constant 0 : i32
    return %c0_i32, %arg1 : i32, i32
  }
  func.func @transform_3(%arg0: i32, %arg1: i32, %arg2: i32) -> (i32, i32) {
    %c0_i32 = arith.constant 0 : i32
    return %arg0, %arg1 : i32, i32
  }
}

</mosaic_0001>

<llo_original>
// kernel: flash_attention_forward.3
$region0: #{flash_attention_forward.3}
  #allocation0 [shape = 'u32[]', space=smem, size = 0x4, offset = 0x4, fixed_abs, tag = 'smem constant byte address 0x4 - core index']
  #allocation1 [shape = 'u32[144,128]{1,0:T(1,128)}', space=vmem, size = 0x12000, scoped, tag = 'internal scratch']
  #allocation2 [shape = 'f32[16,32]{1,0:T(8,128)}', space=vmem, size = 0x2000, scoped, tag = 'scratch operand']
  %s0 = inlined_call_operand.vmem [shape: f32[3,16,32], index: 0, kind: input, shape index: {}]
  %s1 = inlined_call_operand.vmem [shape: f32[3,32,32], index: 1, kind: input, shape index: {}]
  %s2 = inlined_call_operand.vmem [shape: f32[3,1,32], index: 2, kind: input, shape index: {}]
  %s3 = inlined_call_operand.vmem [shape: f32[3,16,32], index: 3, kind: output, shape index: {}]
  %s4 = sld [smem:[#allocation0]]
  $region53: #{flash_attention_forward.3} parent=0
    _
  %s6 = ssub.s32 1, %s4
  %s7 = scalar_select 0, %s6, %s4
  loop: start=0, step=1, limit=5
  $region2: #{flash_attention_forward.3} parent=0 // loop_pre_header
    _
  $region3: #{flash_attention_forward.3} parent=0 // loop_header
    %s9 = sphi 0, %s13
    %p10 = scmp.ge.s32.totalorder %s9, 5
    %s16 = sphi 0, %s42
    %s17 = sphi 0, %s38
    %s18 = sphi 0, %s34
    %s19 = sphi 0, %s30
    %s20 = sphi 0, %s16
    %s21 = sphi 0, %s17
    %s22 = sphi 0, %s18
    %s23 = sphi 0, %s19
    %s24 = sphi 0, %s20
    %s25 = sphi 0, %s21
    %s26 = sphi 0, %s22
    %s27 = sphi 0, %s23
    %s49 = sphi 0, %s51
    %s52 = sphi 0, %s49
    %s53 = sphi 0, %s52
    %s69 = sphi 0, %s53
    %s79 = sphi 0, %s81
    %s82 = sphi 0, %s79
    %s83 = sphi 0, %s82
    %s99 = sphi 0, %s83
    %s107 = sphi 0, %s109
    %s110 = sphi 0, %s107
    %s111 = sphi 0, %s110
    %s127 = sphi 0, %s111
    %s137 = sphi 0, %s139
    %s140 = sphi 0, %s137
    %s141 = sphi 0, %s140
    %s157 = sphi 0, %s141
  $region4: #{flash_attention_forward.3} parent=0 // loop_header_branch
    %12 = sbr.rel (%p10) target = $region8
  $region5: #{flash_attention_forward.3} parent=0 // loop_body
    %s14 = ssub.s32 %s9, 1
    %s15 = ssub.s32 %s9, 2
    %s28 = sadd.s32 1, %s19
    %p29 = scmp.ge.s32.totalorder %s28, 1
    %s30 = scalar_select %p29, 0, %s28
    %s31 = sadd.s32 1, %s18
    %s32 = scalar_select %p29, %s31, %s18
    %p33 = scmp.ge.s32.totalorder %s32, 1
    %s34 = scalar_select %p33, 0, %s32
    %s35 = sadd.s32 1, %s17
    %s36 = scalar_select %p33, %s35, %s17
    %p37 = scmp.ge.s32.totalorder %s36, 1
    %s38 = scalar_select %p37, 0, %s36
    %s39 = sadd.s32 1, %s16
    %s40 = scalar_select %p37, %s39, %s16
    %p41 = scmp.ge.s32.totalorder %s40, 3
    %s42 = scalar_select %p41, 0, %s40
    %s43 = ssub.s32 %s16, %s42
    %s44 = ssub.s32 %s17, %s38
    %s45 = sor.u32 %s43, %s44
    %s46 = ssub.s32 %s19, %s30
    %s47 = sor.u32 %s45, %s46
    %p48 = scmp.eq.s32.totalorder %s47, 0
    %s50 = sadd.s32 %s49, 1
    %s51 = scalar_select %p48, %s49, %s50
    %p54 = pneg %p48
    %p55 = scmp.eq.s32.totalorder %s9, 2
    %p56 = por %p54, %p55
    %p57 = scmp.ne.s32.totalorder %s49, %s52
    %p58 = scmp.eq.s32.totalorder %s9, 0
    %p59 = por %p57, %p58
    %p60 = scmp.ne.s32.totalorder %s49, %s52
    %p61 = scmp.eq.s32.totalorder %s14, 2
    %p62 = por %p60, %p61
    %p63 = scmp.ne.s32.totalorder %s52, %s53
    %p64 = scmp.eq.s32.totalorder %s14, 0
    %p65 = por %p63, %p64
    %p66 = scmp.ne.s32.totalorder %s52, %s53
    %p67 = scmp.eq.s32.totalorder %s15, 2
    %p68 = por %p66, %p67
    %p70 = scmp.ne.s32.totalorder %s53, %s69
    %p71 = scmp.eq.s32.totalorder %s15, 0
    %p72 = por %p70, %p71
    %s73 = ssub.s32 %s16, %s42
    %s74 = ssub.s32 %s19, %s30
    %s75 = sor.u32 %s73, %s74
    %s76 = ssub.s32 %s18, %s34
    %s77 = sor.u32 %s75, %s76
    %p78 = scmp.eq.s32.totalorder %s77, 0
    %s80 = sadd.s32 %s79, 1
    %s81 = scalar_select %p78, %s79, %s80
    %p84 = pneg %p78
    %p85 = scmp.eq.s32.totalorder %s9, 2
    %p86 = por %p84, %p85
    %p87 = scmp.ne.s32.totalorder %s79, %s82
    %p88 = scmp.eq.s32.totalorder %s9, 0
    %p89 = por %p87, %p88
    %p90 = scmp.ne.s32.totalorder %s79, %s82
    %p91 = scmp.eq.s32.totalorder %s14, 2
    %p92 = por %p90, %p91
    %p93 = scmp.ne.s32.totalorder %s82, %s83
    %p94 = scmp.eq.s32.totalorder %s14, 0
    %p95 = por %p93, %p94
    %p96 = scmp.ne.s32.totalorder %s82, %s83
    %p97 = scmp.eq.s32.totalorder %s15, 2
    %p98 = por %p96, %p97
    %p100 = scmp.ne.s32.totalorder %s83, %s99
    %p101 = scmp.eq.s32.totalorder %s15, 0
    %p102 = por %p100, %p101
    %s103 = ssub.s32 %s16, %s42
    %s104 = ssub.s32 %s18, %s34
    %s105 = sor.u32 %s103, %s104
    %p106 = scmp.eq.s32.totalorder %s105, 0
    %s108 = sadd.s32 %s107, 1
    %s109 = scalar_select %p106, %s107, %s108
    %p112 = pneg %p106
    %p113 = scmp.eq.s32.totalorder %s9, 2
    %p114 = por %p112, %p113
    %p115 = scmp.ne.s32.totalorder %s107, %s110
    %p116 = scmp.eq.s32.totalorder %s9, 0
    %p117 = por %p115, %p116
    %p118 = scmp.ne.s32.totalorder %s107, %s110
    %p119 = scmp.eq.s32.totalorder %s14, 2
    %p120 = por %p118, %p119
    %p121 = scmp.ne.s32.totalorder %s110, %s111
    %p122 = scmp.eq.s32.totalorder %s14, 0
    %p123 = por %p121, %p122
    %p124 = scmp.ne.s32.totalorder %s110, %s111
    %p125 = scmp.eq.s32.totalorder %s15, 2
    %p126 = por %p124, %p125
    %p128 = scmp.ne.s32.totalorder %s111, %s127
    %p129 = scmp.eq.s32.totalorder %s15, 0
    %p130 = por %p128, %p129
    %s131 = ssub.s32 %s16, %s42
    %s132 = ssub.s32 %s17, %s38
    %s133 = sor.u32 %s131, %s132
    %s134 = ssub.s32 %s18, %s34
    %s135 = sor.u32 %s133, %s134
    %p136 = scmp.eq.s32.totalorder %s135, 0
    %s138 = sadd.s32 %s137, 1
    %s139 = scalar_select %p136, %s137, %s138
    %p142 = pneg %p136
    %p143 = scmp.eq.s32.totalorder %s9, 2
    %p144 = por %p142, %p143
    %p145 = scmp.ne.s32.totalorder %s137, %s140
    %p146 = scmp.eq.s32.totalorder %s9, 0
    %p147 = por %p145, %p146
    %p148 = scmp.ne.s32.totalorder %s137, %s140
    %p149 = scmp.eq.s32.totalorder %s14, 2
    %p150 = por %p148, %p149
    %p151 = scmp.ne.s32.totalorder %s140, %s141
    %p152 = scmp.eq.s32.totalorder %s14, 0
    %p153 = por %p151, %p152
    %p154 = scmp.ne.s32.totalorder %s140, %s141
    %p155 = scmp.eq.s32.totalorder %s15, 2
    %p156 = por %p154, %p155
    %p158 = scmp.ne.s32.totalorder %s141, %s157
    %p159 = scmp.eq.s32.totalorder %s15, 0
    %p160 = por %p158, %p159
    %p161 = scmp.le.s32.totalorder 1, %s9
    %p162 = scmp.lt.s32.totalorder %s9, 4
    %p163 = pnand %p161, %p162
    %p164 = pneg %p163
    // Predicated region
    $region9: #{flash_attention_forward.3} parent=5 // pred_check
      _
    $region10: #{flash_attention_forward.3} parent=5 // pred_check_branch
      %166 = sbr.rel (%p163) target = $region12
    $region11: #{flash_attention_forward.3} parent=5 // pred_region
      %s167 = ssub.s32 %s9, 1
    $region12: #{flash_attention_forward.3} parent=5 // pred_fallthru
      _
    %p168 = scmp.lt.s32.totalorder %s9, 3
    // Predicated region
    $region13: #{flash_attention_forward.3} parent=5 // pred_check
      %p169 = pneg %p168
    $region14: #{flash_attention_forward.3} parent=5 // pred_check_branch
      %171 = sbr.rel (%p169) target = $region16
    $region15: #{flash_attention_forward.3} parent=5 // pred_region
      // Predicated region
      $region17: #{flash_attention_forward.3} parent=15 // pred_check
        %p172 = pneg %p59
      $region18: #{flash_attention_forward.3} parent=15 // pred_check_branch
        %174 = sbr.rel (%p172) target = $region20
      $region19: #{flash_attention_forward.3} parent=15 // pred_region
        %s175 = smul.u32 2, %s17
        %p176 = scmp.lt.s32.totalorder %s16, 2
        %s177 = scalar_select %p176, %s16, 2
        %p178 = scmp.lt.s32.totalorder %s175, 1
        %s179 = scalar_select %p178, %s175, 1
        %p180 = scmp.lt.s32.totalorder %s19, 0
        %s181 = scalar_select %p180, %s19, 0
        %s182 = sadd.s32 %s181, %s179
        %s183 = smul.addr %s177, 2
        %s184 = sadd.s32 %s182, %s183
        %s185 = smul.addr %s184, 8
        %s186 = scalar_lea.vmem %s0, %s185
        %s187 = smul.u32 2, %s17
      $region20: #{flash_attention_forward.3} parent=15 // pred_fallthru
        _
      // Predicated region
      $region21: #{flash_attention_forward.3} parent=15 // pred_check
        %p188 = pneg %p89
      $region22: #{flash_attention_forward.3} parent=15 // pred_check_branch
        %190 = sbr.rel (%p188) target = $region24
      $region23: #{flash_attention_forward.3} parent=15 // pred_region
        %s191 = smul.u32 4, %s19
        %p192 = scmp.lt.s32.totalorder %s16, 2
        %s193 = scalar_select %p192, %s16, 2
        %p194 = scmp.lt.s32.totalorder %s191, 3
        %s195 = scalar_select %p194, %s191, 3
        %p196 = scmp.lt.s32.totalorder %s18, 0
        %s197 = scalar_select %p196, %s18, 0
        %s198 = sadd.s32 %s197, %s195
        %s199 = smul.addr %s193, 4
        %s200 = sadd.s32 %s198, %s199
        %s201 = smul.addr %s200, 8
        %s202 = scalar_lea.vmem %s1, %s201
        %s203 = smul.u32 4, %s19
      $region24: #{flash_attention_forward.3} parent=15 // pred_fallthru
        _
      // Predicated region
      $region25: #{flash_attention_forward.3} parent=15 // pred_check
        %p204 = pneg %p117
      $region26: #{flash_attention_forward.3} parent=15 // pred_check_branch
        %206 = sbr.rel (%p204) target = $region28
      $region27: #{flash_attention_forward.3} parent=15 // pred_region
        %p207 = scmp.lt.s32.totalorder %s16, 2
        %s208 = scalar_select %p207, %s16, 2
        %p209 = scmp.lt.s32.totalorder %s18, 0
        %s210 = scalar_select %p209, %s18, 0
        %s211 = sadd.s32 %s210, %s208
        %s212 = scalar_lea.vmem %s2, %s211
      $region28: #{flash_attention_forward.3} parent=15 // pred_fallthru
        _
    $region16: #{flash_attention_forward.3} parent=5 // pred_fallthru
      _
    %p213 = scmp.le.s32.totalorder 1, %s9
    %p214 = scmp.lt.s32.totalorder %s9, 4
    %p215 = pnand %p213, %p214
    %p216 = pneg %p215
    // Predicated region
    $region29: #{flash_attention_forward.3} parent=5 // pred_check
      _
    $region30: #{flash_attention_forward.3} parent=5 // pred_check_branch
      %218 = sbr.rel (%p215) target = $region32
    $region31: #{flash_attention_forward.3} parent=5 // pred_region
      %s219 = ssub.s32 %s9, 1
      %s220 = smul.u32 2, %s21
      %p221 = scmp.lt.s32.totalorder %s20, 2
      %s222 = scalar_select %p221, %s20, 2
      %p223 = scmp.lt.s32.totalorder %s220, 1
      %s224 = scalar_select %p223, %s220, 1
      %p225 = scmp.lt.s32.totalorder %s23, 0
      %s226 = scalar_select %p225, %s23, 0
      %s227 = sadd.s32 %s226, %s224
      %s228 = smul.addr %s222, 2
      %s229 = sadd.s32 %s227, %s228
      %s230 = smul.addr %s229, 8
      %s231 = scalar_lea.vmem %s0, %s230
      %p232 = pneg %p65
      %p233 = pneg %p62
      %s234 = smul.u32 4, %s23
      %p235 = scmp.lt.s32.totalorder %s20, 2
      %s236 = scalar_select %p235, %s20, 2
      %p237 = scmp.lt.s32.totalorder %s234, 3
      %s238 = scalar_select %p237, %s234, 3
      %p239 = scmp.lt.s32.totalorder %s22, 0
      %s240 = scalar_select %p239, %s22, 0
      %s241 = sadd.s32 %s240, %s238
      %s242 = smul.addr %s236, 4
      %s243 = sadd.s32 %s241, %s242
      %s244 = smul.addr %s243, 8
      %s245 = scalar_lea.vmem %s1, %s244
      %p246 = pneg %p95
      %p247 = pneg %p92
      %p248 = scmp.lt.s32.totalorder %s20, 2
      %s249 = scalar_select %p248, %s20, 2
      %p250 = scmp.lt.s32.totalorder %s22, 0
      %s251 = scalar_select %p250, %s22, 0
      %s252 = sadd.s32 %s251, %s249
      %s253 = scalar_lea.vmem %s2, %s252
      %p254 = pneg %p123
      %p255 = pneg %p120
      %p256 = pneg %p153
      %p257 = pneg %p150
      %s258 = smul.u32 2, %s21
      %p259 = scmp.lt.s32.totalorder %s20, 2
      %s260 = scalar_select %p259, %s20, 2
      %p261 = scmp.lt.s32.totalorder %s258, 1
      %s262 = scalar_select %p261, %s258, 1
      %p263 = scmp.lt.s32.totalorder %s22, 0
      %s264 = scalar_select %p263, %s22, 0
      %s265 = sadd.s32 %s264, %s262
      %s266 = smul.addr %s260, 2
      %s267 = sadd.s32 %s265, %s266
      %s268 = smul.addr %s267, 8
      %s269 = scalar_lea.vmem %s3, %s268
      %s270 = smul.u32 2, %s21
      %p271 = scmp.lt.s32.totalorder %s20, 2
      %s272 = scalar_select %p271, %s20, 2
      %p273 = scmp.lt.s32.totalorder %s270, 1
      %s274 = scalar_select %p273, %s270, 1
      %p275 = scmp.lt.s32.totalorder %s23, 0
      %s276 = scalar_select %p275, %s23, 0
      %s277 = sadd.s32 %s276, %s274
      %s278 = smul.addr %s272, 2
      %s279 = sadd.s32 %s277, %s278
      %s280 = smul.addr %s279, 8
      %s281 = scalar_lea.vmem %s0, %s280
      %s282 = smul.u32 2, %s21
      %s283 = smul.u32 4, %s23
      %p284 = scmp.lt.s32.totalorder %s20, 2
      %s285 = scalar_select %p284, %s20, 2
      %p286 = scmp.lt.s32.totalorder %s283, 3
      %s287 = scalar_select %p286, %s283, 3
      %p288 = scmp.lt.s32.totalorder %s22, 0
      %s289 = scalar_select %p288, %s22, 0
      %s290 = sadd.s32 %s289, %s287
      %s291 = smul.addr %s285, 4
      %s292 = sadd.s32 %s290, %s291
      %s293 = smul.addr %s292, 8
      %s294 = scalar_lea.vmem %s1, %s293
      %s295 = smul.u32 4, %s23
      %p296 = scmp.lt.s32.totalorder %s20, 2
      %s297 = scalar_select %p296, %s20, 2
      %p298 = scmp.lt.s32.totalorder %s22, 0
      %s299 = scalar_select %p298, %s22, 0
      %s300 = sadd.s32 %s299, %s297
      %s301 = scalar_lea.vmem %s2, %s300
      %s302 = smul.u32 2, %s21
      %p303 = scmp.lt.s32.totalorder %s20, 2
      %s304 = scalar_select %p303, %s20, 2
      %p305 = scmp.lt.s32.totalorder %s302, 1
      %s306 = scalar_select %p305, %s302, 1
      %p307 = scmp.lt.s32.totalorder %s22, 0
      %s308 = scalar_select %p307, %s22, 0
      %s309 = sadd.s32 %s308, %s306
      %s310 = smul.addr %s304, 2
      %s311 = sadd.s32 %s309, %s310
      %s312 = smul.addr %s311, 8
      %s313 = scalar_lea.vmem %s3, %s312
      %s314 = smul.u32 2, %s21
      %p315 = scmp.eq.s32.totalorder %s23, 0
      // Predicated region
      $region33: #{flash_attention_forward.3} parent=31 // pred_check
        %p316 = pneg %p315
      $region34: #{flash_attention_forward.3} parent=31 // pred_check_branch
        %318 = sbr.rel (%p316) target = $region36
      $region35: #{flash_attention_forward.3} parent=31 // pred_region
        %vm319 = vcmask 261120
        %320 = vst.msk [vmem:[#allocation2] sm:$0xff] %vm319, 0.0
        %321 = vst.msk [vmem:[#allocation2 + $0x8] sm:$0xff] %vm319, 0.0
      $region36: #{flash_attention_forward.3} parent=31 // pred_fallthru
        _
      %v322 = vld [vmem:[#allocation2] sm:$0xff]
      %v323 = vld [vmem:[#allocation2 + $0x8] sm:$0xff]
      %v324 = vld [vmem:[%s281] sm:$0xff]
      %v325 = vld [vmem:[%s281 + $0x8] sm:$0xff]
      %v326 = vld [vmem:[%s294] sm:$0xff]
      %v327 = vld [vmem:[%s294 + $0x8] sm:$0xff]
      %v328 = vld [vmem:[%s294 + $0x10] sm:$0xff]
      %v329 = vld [vmem:[%s294 + $0x18] sm:$0xff]
      %vm330 = vcmask 261120
      %v332 = vsel %vm330, %v324, 0
      %v335 = vsel %vm330, %v325, 0
      %337 = vmatprep.subr.mxu0 0.0
      %338 = vmatpush1.msra.mxu0 0.0
      %339 = vmatprep.subr.mxu0 0.0
      %340 = vmatpush1.msra.mxu0 0.0
      %341 = vmatprep.subr.mxu0 0.0
      %342 = vmatpush1.msra.mxu0 0.0
      %343 = vmatprep.subr.mxu0 0.0
      %344 = vmatpush1.msra.mxu0 0.0
      %345 = vmatprep.subr.mxu0 0.0
      %346 = vmatpush1.msra.mxu0 0.0
      %347 = vmatprep.subr.mxu0 0.0
      %348 = vmatpush1.msra.mxu0 0.0
      %349 = vmatprep.subr.mxu0 0.0
      %350 = vmatpush1.msra.mxu0 0.0
      %351 = vmatprep.subr.mxu0 0.0
      %352 = vmatpush1.msra.mxu0 0.0
      %353 = vmatprep.subr.mxu0 0.0
      %354 = vmatpush1.msra.mxu0 0.0
      %355 = vmatprep.subr.mxu0 0.0
      %356 = vmatpush1.msra.mxu0 0.0
      %357 = vmatprep.subr.mxu0 0.0
      %358 = vmatpush1.msra.mxu0 0.0
      %359 = vmatprep.subr.mxu0 0.0
      %360 = vmatpush1.msra.mxu0 0.0
      %361 = vmatprep.subr.mxu0 0.0
      %362 = vmatpush1.msra.mxu0 %v329
      %363 = vmatprep.subr.mxu0 0.0
      %364 = vmatpush1.msra.mxu0 %v328
      %365 = vmatprep.subr.mxu0 0.0
      %366 = vmatpush1.msra.mxu0 %v327
      %367 = vmatprep.subr.mxu0 0.0
      %368 = vmatpush1.msra.mxu0 %v326
      %369 = vmatprep.subr.mxu0 0.0
      %370 = vmatpush2.msra.mxu0 0.0
      %371 = vmatprep.subr.mxu0 0.0
      %372 = vmatpush2.msra.mxu0 0.0
      %373 = vmatprep.subr.mxu0 0.0
      %374 = vmatpush2.msra.mxu0 0.0
      %375 = vmatprep.subr.mxu0 0.0
      %376 = vmatpush2.msra.mxu0 0.0
      %377 = vmatprep.subr.mxu0 0.0
      %378 = vmatpush2.msra.mxu0 0.0
      %379 = vmatprep.subr.mxu0 0.0
      %380 = vmatpush2.msra.mxu0 0.0
      %381 = vmatprep.subr.mxu0 0.0
      %382 = vmatpush2.msra.mxu0 0.0
      %383 = vmatprep.subr.mxu0 0.0
      %384 = vmatpush2.msra.mxu0 0.0
      %385 = vmatprep.subr.mxu0 0.0
      %386 = vmatpush2.msra.mxu0 0.0
      %387 = vmatprep.subr.mxu0 0.0
      %388 = vmatpush2.msra.mxu0 0.0
      %389 = vmatprep.subr.mxu0 0.0
      %390 = vmatpush2.msra.mxu0 0.0
      %391 = vmatprep.subr.mxu0 0.0
      %392 = vmatpush2.msra.mxu0 0.0
      %393 = vmatprep.subr.mxu0 0.0
      %394 = vmatpush2.msra.mxu0 0.0
      %395 = vmatprep.subr.mxu0 0.0
      %396 = vmatpush2.msra.mxu0 0.0
      %397 = vmatprep.subr.mxu0 0.0
      %398 = vmatpush2.msra.mxu0 0.0
      %399 = vmatprep.subr.mxu0 0.0
      %400 = vmatpush2.msra.mxu0 0.0
      %401 = vmatprep.mubr.f32.mxu0 0.0
      %402 = vmatmul.mubr.f32.gmra.mxu0 %v332
      %v403 = vpop.f32.mrf.mxu0
      %v404 = vadd.f32 0.0, %v403
      %v405 = vpop.f32.mrf.mxu0
      %406 = vmatprep.mubr.f32.mxu0 0.0
      %407 = vmatmul.mubr.f32.gmra.mxu0 %v335
      %v408 = vpop.f32.mrf.mxu0
      %v409 = vadd.f32 0.0, %v408
      %v410 = vpop.f32.mrf.mxu0
      %411 = vdwg.mxu0
      %v412 = vadd.f32 %v322, %v404
      %v413 = vadd.f32 %v323, %v409
      %414 = vst.msk [vmem:[#allocation2] sm:$0xff] %vm330, %v412
      %415 = vst.msk [vmem:[#allocation2 + $0x8] sm:$0xff] %vm330, %v413
      // Predicated region
      $region37: #{flash_attention_forward.3} parent=31 // pred_check
        %p416 = pneg %p315
      $region38: #{flash_attention_forward.3} parent=31 // pred_check_branch
        %418 = sbr.rel (%p416) target = $region40
      $region39: #{flash_attention_forward.3} parent=31 // pred_region
        %v419 = vld [vmem:[#allocation2] sm:$0xff]
        %v420 = vld [vmem:[#allocation2 + $0x8] sm:$0xff]
        %v421 = vld [vmem:[%s301] sm:$0x1]
        %v423 = vlaneseq
        %v424 = vshrl.u32 %v423, 7
        %v425 = vsub.s32 0, %v424
        %v426 = vrot.slane %v421, %v425
        %v428 = vadd.f32 %v419, %v426
        %v429 = vadd.f32 %v420, %v426
        %430 = vst.msk [vmem:[%s313] sm:$0xff] %vm330, %v428
        %431 = vst.msk [vmem:[%s313 + $0x8] sm:$0xff] %vm330, %v429
      $region40: #{flash_attention_forward.3} parent=31 // pred_fallthru
        _
      %s432 = smul.u32 2, %s21
      %p433 = scmp.lt.s32.totalorder %s20, 2
      %s434 = scalar_select %p433, %s20, 2
      %p435 = scmp.lt.s32.totalorder %s432, 1
      %s436 = scalar_select %p435, %s432, 1
      %p437 = scmp.lt.s32.totalorder %s22, 0
      %s438 = scalar_select %p437, %s22, 0
      %s439 = sadd.s32 %s438, %s436
      %s440 = smul.addr %s434, 2
      %s441 = sadd.s32 %s439, %s440
      %s442 = smul.addr %s441, 8
      %s443 = scalar_lea.vmem %s3, %s442
      // Predicated region
      $region41: #{flash_attention_forward.3} parent=31 // pred_check
        %p444 = pneg %p150
      $region42: #{flash_attention_forward.3} parent=31 // pred_check_branch
        %446 = sbr.rel (%p444) target = $region44
      $region43: #{flash_attention_forward.3} parent=31 // pred_region
        %s447 = smul.u32 2, %s21
      $region44: #{flash_attention_forward.3} parent=31 // pred_fallthru
        _
    $region32: #{flash_attention_forward.3} parent=5 // pred_fallthru
      _
    %p448 = scmp.le.s32.totalorder 2, %s9
    // Predicated region
    $region45: #{flash_attention_forward.3} parent=5 // pred_check
      %p449 = pneg %p448
    $region46: #{flash_attention_forward.3} parent=5 // pred_check_branch
      %451 = sbr.rel (%p449) target = $region48
    $region47: #{flash_attention_forward.3} parent=5 // pred_region
      %s452 = ssub.s32 %s9, 2
      // Predicated region
      $region49: #{flash_attention_forward.3} parent=47 // pred_check
        %p453 = pneg %p156
      $region50: #{flash_attention_forward.3} parent=47 // pred_check_branch
        %455 = sbr.rel (%p453) target = $region52
      $region51: #{flash_attention_forward.3} parent=47 // pred_region
        %s456 = smul.u32 2, %s25
        %p457 = scmp.lt.s32.totalorder %s24, 2
        %s458 = scalar_select %p457, %s24, 2
        %p459 = scmp.lt.s32.totalorder %s456, 1
        %s460 = scalar_select %p459, %s456, 1
        %p461 = scmp.lt.s32.totalorder %s26, 0
        %s462 = scalar_select %p461, %s26, 0
        %s463 = sadd.s32 %s462, %s460
        %s464 = smul.addr %s458, 2
        %s465 = sadd.s32 %s463, %s464
        %s466 = smul.addr %s465, 8
        %s467 = scalar_lea.vmem %s3, %s466
      $region52: #{flash_attention_forward.3} parent=47 // pred_fallthru
        _
    $region48: #{flash_attention_forward.3} parent=5 // pred_fallthru
      _
  $region6: #{flash_attention_forward.3} parent=0 // loop_footer
    %s13 = sadd.s32 1, %s9
  $region7: #{flash_attention_forward.3} parent=0 // loop_footer_branch
    %8 = sbr.rel target = $region3
  $region8: #{flash_attention_forward.3} parent=0 // loop_exit
    _

// kernel: flash_attention_forward.5
$region0: #{flash_attention_forward.5}
  #allocation0 [shape = 'u32[]', space=smem, size = 0x4, offset = 0x4, fixed_abs, tag = 'smem constant byte address 0x4 - core index']
  #allocation1 [shape = 'u32[144,128]{1,0:T(1,128)}', space=vmem, size = 0x12000, scoped, tag = 'internal scratch']
  #allocation2 [shape = 'f32[16,32]{1,0:T(8,128)}', space=vmem, size = 0x2000, scoped, tag = 'scratch operand']
  %s0 = inlined_call_operand.vmem [shape: f32[16,32], index: 0, kind: input, shape index: {}]
  %s1 = inlined_call_operand.vmem [shape: f32[32,32], index: 1, kind: input, shape index: {}]
  %s2 = inlined_call_operand.vmem [shape: f32[1,32], index: 2, kind: input, shape index: {}]
  %s3 = inlined_call_operand.hbm [shape: f32[16,32], index: 3, kind: output, shape index: {}]
  %s4 = sld [smem:[#allocation0]]
  $region30: #{flash_attention_forward.5} parent=0
    _
  %s6 = ssub.s32 1, %s4
  %s7 = scalar_select 0, %s6, %s4
  $region1: #{flash_attention_forward.5} parent=0
    #allocation3 [shape = 'u8[8192]{0}', space=vmem, size = 0x2000, scoped, tag = 'output window, operand 0, single buffered']
    #allocation4 [shape = 's32[1]{0}', space=sflag, size = 0x4, scoped, tag = 'scoped memory for flash_attention_forward.5']
    %8 = vsyncpa [#allocation4], 0
    // Predicated region
    $region2: #{flash_attention_forward.5} parent=1 // pred_check
      _
    $region3: #{flash_attention_forward.5} parent=1 // pred_check_branch
      %10 = sbr.rel (0) target = $region5
    $region4: #{flash_attention_forward.5} parent=1 // pred_region
      _
    $region5: #{flash_attention_forward.5} parent=1 // pred_fallthru
      _
    // Predicated region
    $region6: #{flash_attention_forward.5} parent=1 // pred_check
      _
    $region7: #{flash_attention_forward.5} parent=1 // pred_check_branch
      %12 = sbr.rel (0) target = $region9
    $region8: #{flash_attention_forward.5} parent=1 // pred_region
      _
    $region9: #{flash_attention_forward.5} parent=1 // pred_fallthru
      _
    // Predicated region
    $region10: #{flash_attention_forward.5} parent=1 // pred_check
      _
    $region11: #{flash_attention_forward.5} parent=1 // pred_check_branch
      %14 = sbr.rel (0) target = $region13
    $region12: #{flash_attention_forward.5} parent=1 // pred_region
      _
    $region13: #{flash_attention_forward.5} parent=1 // pred_fallthru
      _
    %p15 = scmp.eq.s32.totalorder 0, 0
    // Predicated region
    $region14: #{flash_attention_forward.5} parent=1 // pred_check
      %p16 = pneg %p15
    $region15: #{flash_attention_forward.5} parent=1 // pred_check_branch
      %18 = sbr.rel (%p16) target = $region17
    $region16: #{flash_attention_forward.5} parent=1 // pred_region
      %vm19 = vcmask 261120
      %20 = vst.msk [vmem:[#allocation2] sm:$0xff] %vm19, 0.0
      %21 = vst.msk [vmem:[#allocation2 + $0x8] sm:$0xff] %vm19, 0.0
    $region17: #{flash_attention_forward.5} parent=1 // pred_fallthru
      _
    %v22 = vld [vmem:[#allocation2] sm:$0xff]
    %v23 = vld [vmem:[#allocation2 + $0x8] sm:$0xff]
    %v24 = vld [vmem:[%s0] sm:$0xff]
    %v25 = vld [vmem:[%s0 + $0x8] sm:$0xff]
    %v26 = vld [vmem:[%s1] sm:$0xff]
    %v27 = vld [vmem:[%s1 + $0x8] sm:$0xff]
    %v28 = vld [vmem:[%s1 + $0x10] sm:$0xff]
    %v29 = vld [vmem:[%s1 + $0x18] sm:$0xff]
    %vm30 = vcmask 261120
    %v32 = vsel %vm30, %v24, 0
    %v35 = vsel %vm30, %v25, 0
    %37 = vmatprep.subr.mxu0 0.0
    %38 = vmatpush1.msra.mxu0 0.0
    %39 = vmatprep.subr.mxu0 0.0
    %40 = vmatpush1.msra.mxu0 0.0
    %41 = vmatprep.subr.mxu0 0.0
    %42 = vmatpush1.msra.mxu0 0.0
    %43 = vmatprep.subr.mxu0 0.0
    %44 = vmatpush1.msra.mxu0 0.0
    %45 = vmatprep.subr.mxu0 0.0
    %46 = vmatpush1.msra.mxu0 0.0
    %47 = vmatprep.subr.mxu0 0.0
    %48 = vmatpush1.msra.mxu0 0.0
    %49 = vmatprep.subr.mxu0 0.0
    %50 = vmatpush1.msra.mxu0 0.0
    %51 = vmatprep.subr.mxu0 0.0
    %52 = vmatpush1.msra.mxu0 0.0
    %53 = vmatprep.subr.mxu0 0.0
    %54 = vmatpush1.msra.mxu0 0.0
    %55 = vmatprep.subr.mxu0 0.0
    %56 = vmatpush1.msra.mxu0 0.0
    %57 = vmatprep.subr.mxu0 0.0
    %58 = vmatpush1.msra.mxu0 0.0
    %59 = vmatprep.subr.mxu0 0.0
    %60 = vmatpush1.msra.mxu0 0.0
    %61 = vmatprep.subr.mxu0 0.0
    %62 = vmatpush1.msra.mxu0 %v29
    %63 = vmatprep.subr.mxu0 0.0
    %64 = vmatpush1.msra.mxu0 %v28
    %65 = vmatprep.subr.mxu0 0.0
    %66 = vmatpush1.msra.mxu0 %v27
    %67 = vmatprep.subr.mxu0 0.0
    %68 = vmatpush1.msra.mxu0 %v26
    %69 = vmatprep.subr.mxu0 0.0
    %70 = vmatpush2.msra.mxu0 0.0
    %71 = vmatprep.subr.mxu0 0.0
    %72 = vmatpush2.msra.mxu0 0.0
    %73 = vmatprep.subr.mxu0 0.0
    %74 = vmatpush2.msra.mxu0 0.0
    %75 = vmatprep.subr.mxu0 0.0
    %76 = vmatpush2.msra.mxu0 0.0
    %77 = vmatprep.subr.mxu0 0.0
    %78 = vmatpush2.msra.mxu0 0.0
    %79 = vmatprep.subr.mxu0 0.0
    %80 = vmatpush2.msra.mxu0 0.0
    %81 = vmatprep.subr.mxu0 0.0
    %82 = vmatpush2.msra.mxu0 0.0
    %83 = vmatprep.subr.mxu0 0.0
    %84 = vmatpush2.msra.mxu0 0.0
    %85 = vmatprep.subr.mxu0 0.0
    %86 = vmatpush2.msra.mxu0 0.0
    %87 = vmatprep.subr.mxu0 0.0
    %88 = vmatpush2.msra.mxu0 0.0
    %89 = vmatprep.subr.mxu0 0.0
    %90 = vmatpush2.msra.mxu0 0.0
    %91 = vmatprep.subr.mxu0 0.0
    %92 = vmatpush2.msra.mxu0 0.0
    %93 = vmatprep.subr.mxu0 0.0
    %94 = vmatpush2.msra.mxu0 0.0
    %95 = vmatprep.subr.mxu0 0.0
    %96 = vmatpush2.msra.mxu0 0.0
    %97 = vmatprep.subr.mxu0 0.0
    %98 = vmatpush2.msra.mxu0 0.0
    %99 = vmatprep.subr.mxu0 0.0
    %100 = vmatpush2.msra.mxu0 0.0
    %101 = vmatprep.mubr.f32.mxu0 0.0
    %102 = vmatmul.mubr.f32.gmra.mxu0 %v32
    %v103 = vpop.f32.mrf.mxu0
    %v104 = vadd.f32 0.0, %v103
    %v105 = vpop.f32.mrf.mxu0
    %106 = vmatprep.mubr.f32.mxu0 0.0
    %107 = vmatmul.mubr.f32.gmra.mxu0 %v35
    %v108 = vpop.f32.mrf.mxu0
    %v109 = vadd.f32 0.0, %v108
    %v110 = vpop.f32.mrf.mxu0
    %111 = vdwg.mxu0
    %v112 = vadd.f32 %v22, %v104
    %v113 = vadd.f32 %v23, %v109
    %114 = vst.msk [vmem:[#allocation2] sm:$0xff] %vm30, %v112
    %115 = vst.msk [vmem:[#allocation2 + $0x8] sm:$0xff] %vm30, %v113
    // Predicated region
    $region18: #{flash_attention_forward.5} parent=1 // pred_check
      %p116 = pneg %p15
    $region19: #{flash_attention_forward.5} parent=1 // pred_check_branch
      %118 = sbr.rel (%p116) target = $region21
    $region20: #{flash_attention_forward.5} parent=1 // pred_region
      %v119 = vld [vmem:[#allocation2] sm:$0xff]
      %v120 = vld [vmem:[#allocation2 + $0x8] sm:$0xff]
      %v121 = vld [vmem:[%s2] sm:$0x1]
      %v123 = vlaneseq
      %v124 = vshrl.u32 %v123, 7
      %v125 = vsub.s32 0, %v124
      %v126 = vrot.slane %v121, %v125
      %v128 = vadd.f32 %v119, %v126
      %v129 = vadd.f32 %v120, %v126
      %130 = vst.msk [vmem:[#allocation3] sm:$0xff] %vm30, %v128
      %131 = vst.msk [vmem:[#allocation3 + $0x8] sm:$0xff] %vm30, %v129
    $region21: #{flash_attention_forward.5} parent=1 // pred_fallthru
      _
    // Predicated region
    $region22: #{flash_attention_forward.5} parent=1 // pred_check
      _
    $region23: #{flash_attention_forward.5} parent=1 // pred_check_branch
      %133 = sbr.rel (0) target = $region25
    $region24: #{flash_attention_forward.5} parent=1 // pred_region
      %s135 = ssub.s32 256, 256
      %136 = vsyncadd [#allocation4], %s135
      %s137 = sshll.u32 [#allocation3], 4
      %s138 = int_to_ptr.vmem [resolvable:$true] %s137
      %143 = dma.vmem_to_hbm [thread:$0]  %s138, 256, %s3, [#allocation4], 128, 128, 8
    $region25: #{flash_attention_forward.5} parent=1 // pred_fallthru
      _
    // Predicated region
    $region26: #{flash_attention_forward.5} parent=1 // pred_check
      _
    $region27: #{flash_attention_forward.5} parent=1 // pred_check_branch
      %145 = sbr.rel (0) target = $region29
    $region28: #{flash_attention_forward.5} parent=1 // pred_region
      %146 = dma.done [#allocation4], 256
    $region29: #{flash_attention_forward.5} parent=1 // pred_fallthru
      _
    %147 = vsyncpa [#allocation4], 1

// kernel: flash_attention_forward.4
$region0: #{flash_attention_forward.4}
  #allocation0 [shape = 'u32[]', space=smem, size = 0x4, offset = 0x4, fixed_abs, tag = 'smem constant byte address 0x4 - core index']
  #allocation1 [shape = 'u32[144,128]{1,0:T(1,128)}', space=vmem, size = 0x12000, scoped, tag = 'internal scratch']
  #allocation2 [shape = 'f32[8,4]{1,0:T(8,128)}', space=vmem, size = 0x1000, scoped, tag = 'scratch operand']
  #allocation3 [shape = 'f32[8,4]{1,0:T(8,128)}', space=vmem, size = 0x1000, scoped, tag = 'scratch operand']
  #allocation4 [shape = 'f32[8,32]{1,0:T(8,128)}', space=vmem, size = 0x1000, scoped, tag = 'scratch operand']
  %s0 = inlined_call_operand.vmem [shape: f32[3,2,8,32], index: 0, kind: input, shape index: {}, may-alias: {0,1,2}]
  %s1 = inlined_call_operand.vmem [shape: f32[3,2,8,32], index: 1, kind: input, shape index: {}, may-alias: {0,1,2}]
  %s2 = inlined_call_operand.vmem [shape: f32[3,2,8,32], index: 2, kind: input, shape index: {}, may-alias: {0,1,2}]
  %s3 = inlined_call_operand.vmem [shape: f32[2,8,32], index: 3, kind: output, shape index: {}]
  %s4 = sld [smem:[#allocation0]]
  $region53: #{flash_attention_forward.4} parent=0
    _
  %s6 = ssub.s32 1, %s4
  %s7 = scalar_select 0, %s6, %s4
  loop: start=0, step=1, limit=4
  $region2: #{flash_attention_forward.4} parent=0 // loop_pre_header
    _
  $region3: #{flash_attention_forward.4} parent=0 // loop_header
    %s9 = sphi 0, %s13
    %p10 = scmp.ge.s32.totalorder %s9, 4
    %s16 = sphi 0, %s42
    %s17 = sphi 0, %s38
    %s18 = sphi 0, %s34
    %s19 = sphi 0, %s30
    %s20 = sphi 0, %s16
    %s21 = sphi 0, %s17
    %s22 = sphi 0, %s18
    %s23 = sphi 0, %s19
    %s24 = sphi 0, %s20
    %s25 = sphi 0, %s21
    %s26 = sphi 0, %s22
    %s27 = sphi 0, %s23
    %s49 = sphi 0, %s51
    %s52 = sphi 0, %s49
    %s53 = sphi 0, %s52
    %s69 = sphi 0, %s53
    %s79 = sphi 0, %s81
    %s82 = sphi 0, %s79
    %s83 = sphi 0, %s82
    %s99 = sphi 0, %s83
    %s109 = sphi 0, %s111
    %s112 = sphi 0, %s109
    %s113 = sphi 0, %s112
    %s129 = sphi 0, %s113
    %s139 = sphi 0, %s141
    %s142 = sphi 0, %s139
    %s143 = sphi 0, %s142
    %s159 = sphi 0, %s143
  $region4: #{flash_attention_forward.4} parent=0 // loop_header_branch
    %12 = sbr.rel (%p10) target = $region8
  $region5: #{flash_attention_forward.4} parent=0 // loop_body
    %s14 = ssub.s32 %s9, 1
    %s15 = ssub.s32 %s9, 2
    %s28 = sadd.s32 1, %s19
    %p29 = scmp.ge.s32.totalorder %s28, 1
    %s30 = scalar_select %p29, 0, %s28
    %s31 = sadd.s32 1, %s18
    %s32 = scalar_select %p29, %s31, %s18
    %p33 = scmp.ge.s32.totalorder %s32, 1
    %s34 = scalar_select %p33, 0, %s32
    %s35 = sadd.s32 1, %s17
    %s36 = scalar_select %p33, %s35, %s17
    %p37 = scmp.ge.s32.totalorder %s36, 1
    %s38 = scalar_select %p37, 0, %s36
    %s39 = sadd.s32 1, %s16
    %s40 = scalar_select %p37, %s39, %s16
    %p41 = scmp.ge.s32.totalorder %s40, 2
    %s42 = scalar_select %p41, 0, %s40
    %s43 = ssub.s32 %s16, %s42
    %s44 = ssub.s32 %s18, %s34
    %s45 = sor.u32 %s43, %s44
    %s46 = ssub.s32 %s17, %s38
    %s47 = sor.u32 %s45, %s46
    %p48 = scmp.eq.s32.totalorder %s47, 0
    %s50 = sadd.s32 %s49, 1
    %s51 = scalar_select %p48, %s49, %s50
    %p54 = pneg %p48
    %p55 = scmp.eq.s32.totalorder %s9, 1
    %p56 = por %p54, %p55
    %p57 = scmp.ne.s32.totalorder %s49, %s52
    %p58 = scmp.eq.s32.totalorder %s9, 0
    %p59 = por %p57, %p58
    %p60 = scmp.ne.s32.totalorder %s49, %s52
    %p61 = scmp.eq.s32.totalorder %s14, 1
    %p62 = por %p60, %p61
    %p63 = scmp.ne.s32.totalorder %s52, %s53
    %p64 = scmp.eq.s32.totalorder %s14, 0
    %p65 = por %p63, %p64
    %p66 = scmp.ne.s32.totalorder %s52, %s53
    %p67 = scmp.eq.s32.totalorder %s15, 1
    %p68 = por %p66, %p67
    %p70 = scmp.ne.s32.totalorder %s53, %s69
    %p71 = scmp.eq.s32.totalorder %s15, 0
    %p72 = por %p70, %p71
    %s73 = ssub.s32 %s16, %s42
    %s74 = ssub.s32 %s19, %s30
    %s75 = sor.u32 %s73, %s74
    %s76 = ssub.s32 %s17, %s38
    %s77 = sor.u32 %s75, %s76
    %p78 = scmp.eq.s32.totalorder %s77, 0
    %s80 = sadd.s32 %s79, 1
    %s81 = scalar_select %p78, %s79, %s80
    %p84 = pneg %p78
    %p85 = scmp.eq.s32.totalorder %s9, 1
    %p86 = por %p84, %p85
    %p87 = scmp.ne.s32.totalorder %s79, %s82
    %p88 = scmp.eq.s32.totalorder %s9, 0
    %p89 = por %p87, %p88
    %p90 = scmp.ne.s32.totalorder %s79, %s82
    %p91 = scmp.eq.s32.totalorder %s14, 1
    %p92 = por %p90, %p91
    %p93 = scmp.ne.s32.totalorder %s82, %s83
    %p94 = scmp.eq.s32.totalorder %s14, 0
    %p95 = por %p93, %p94
    %p96 = scmp.ne.s32.totalorder %s82, %s83
    %p97 = scmp.eq.s32.totalorder %s15, 1
    %p98 = por %p96, %p97
    %p100 = scmp.ne.s32.totalorder %s83, %s99
    %p101 = scmp.eq.s32.totalorder %s15, 0
    %p102 = por %p100, %p101
    %s103 = ssub.s32 %s16, %s42
    %s104 = ssub.s32 %s19, %s30
    %s105 = sor.u32 %s103, %s104
    %s106 = ssub.s32 %s17, %s38
    %s107 = sor.u32 %s105, %s106
    %p108 = scmp.eq.s32.totalorder %s107, 0
    %s110 = sadd.s32 %s109, 1
    %s111 = scalar_select %p108, %s109, %s110
    %p114 = pneg %p108
    %p115 = scmp.eq.s32.totalorder %s9, 1
    %p116 = por %p114, %p115
    %p117 = scmp.ne.s32.totalorder %s109, %s112
    %p118 = scmp.eq.s32.totalorder %s9, 0
    %p119 = por %p117, %p118
    %p120 = scmp.ne.s32.totalorder %s109, %s112
    %p121 = scmp.eq.s32.totalorder %s14, 1
    %p122 = por %p120, %p121
    %p123 = scmp.ne.s32.totalorder %s112, %s113
    %p124 = scmp.eq.s32.totalorder %s14, 0
    %p125 = por %p123, %p124
    %p126 = scmp.ne.s32.totalorder %s112, %s113
    %p127 = scmp.eq.s32.totalorder %s15, 1
    %p128 = por %p126, %p127
    %p130 = scmp.ne.s32.totalorder %s113, %s129
    %p131 = scmp.eq.s32.totalorder %s15, 0
    %p132 = por %p130, %p131
    %s133 = ssub.s32 %s16, %s42
    %s134 = ssub.s32 %s18, %s34
    %s135 = sor.u32 %s133, %s134
    %s136 = ssub.s32 %s17, %s38
    %s137 = sor.u32 %s135, %s136
    %p138 = scmp.eq.s32.totalorder %s137, 0
    %s140 = sadd.s32 %s139, 1
    %s141 = scalar_select %p138, %s139, %s140
    %p144 = pneg %p138
    %p145 = scmp.eq.s32.totalorder %s9, 1
    %p146 = por %p144, %p145
    %p147 = scmp.ne.s32.totalorder %s139, %s142
    %p148 = scmp.eq.s32.totalorder %s9, 0
    %p149 = por %p147, %p148
    %p150 = scmp.ne.s32.totalorder %s139, %s142
    %p151 = scmp.eq.s32.totalorder %s14, 1
    %p152 = por %p150, %p151
    %p153 = scmp.ne.s32.totalorder %s142, %s143
    %p154 = scmp.eq.s32.totalorder %s14, 0
    %p155 = por %p153, %p154
    %p156 = scmp.ne.s32.totalorder %s142, %s143
    %p157 = scmp.eq.s32.totalorder %s15, 1
    %p158 = por %p156, %p157
    %p160 = scmp.ne.s32.totalorder %s143, %s159
    %p161 = scmp.eq.s32.totalorder %s15, 0
    %p162 = por %p160, %p161
    %p163 = scmp.le.s32.totalorder 1, %s9
    %p164 = scmp.lt.s32.totalorder %s9, 3
    %p165 = pnand %p163, %p164
    %p166 = pneg %p165
    // Predicated region
    $region9: #{flash_attention_forward.4} parent=5 // pred_check
      _
    $region10: #{flash_attention_forward.4} parent=5 // pred_check_branch
      %168 = sbr.rel (%p165) target = $region12
    $region11: #{flash_attention_forward.4} parent=5 // pred_region
      %s169 = ssub.s32 %s9, 1
    $region12: #{flash_attention_forward.4} parent=5 // pred_fallthru
      _
    %p170 = scmp.lt.s32.totalorder %s9, 2
    // Predicated region
    $region13: #{flash_attention_forward.4} parent=5 // pred_check
      %p171 = pneg %p170
    $region14: #{flash_attention_forward.4} parent=5 // pred_check_branch
      %173 = sbr.rel (%p171) target = $region16
    $region15: #{flash_attention_forward.4} parent=5 // pred_region
      // Predicated region
      $region17: #{flash_attention_forward.4} parent=15 // pred_check
        %p174 = pneg %p59
      $region18: #{flash_attention_forward.4} parent=15 // pred_check_branch
        %176 = sbr.rel (%p174) target = $region20
      $region19: #{flash_attention_forward.4} parent=15 // pred_region
        %p177 = scmp.lt.s32.totalorder %s16, 1
        %s178 = scalar_select %p177, %s16, 1
        %p179 = scmp.lt.s32.totalorder %s18, 0
        %s180 = scalar_select %p179, %s18, 0
        %p181 = scmp.lt.s32.totalorder %s17, 0
        %s182 = scalar_select %p181, %s17, 0
        %s183 = sadd.s32 %s182, %s180
        %s184 = sadd.s32 %s183, %s178
        %s185 = smul.addr %s184, 8
        %s186 = scalar_lea.vmem %s0, %s185
      $region20: #{flash_attention_forward.4} parent=15 // pred_fallthru
        _
      // Predicated region
      $region21: #{flash_attention_forward.4} parent=15 // pred_check
        %p187 = pneg %p89
      $region22: #{flash_attention_forward.4} parent=15 // pred_check_branch
        %189 = sbr.rel (%p187) target = $region24
      $region23: #{flash_attention_forward.4} parent=15 // pred_region
        %p190 = scmp.lt.s32.totalorder %s16, 1
        %s191 = scalar_select %p190, %s16, 1
        %p192 = scmp.lt.s32.totalorder %s19, 0
        %s193 = scalar_select %p192, %s19, 0
        %p194 = scmp.lt.s32.totalorder %s17, 0
        %s195 = scalar_select %p194, %s17, 0
        %s196 = sadd.s32 %s195, %s193
        %s197 = sadd.s32 %s196, %s191
        %s198 = sadd.s32 %s197, 2
        %s199 = smul.addr %s198, 8
        %s200 = scalar_lea.vmem %s1, %s199
      $region24: #{flash_attention_forward.4} parent=15 // pred_fallthru
        _
      // Predicated region
      $region25: #{flash_attention_forward.4} parent=15 // pred_check
        %p201 = pneg %p119
      $region26: #{flash_attention_forward.4} parent=15 // pred_check_branch
        %203 = sbr.rel (%p201) target = $region28
      $region27: #{flash_attention_forward.4} parent=15 // pred_region
        %p204 = scmp.lt.s32.totalorder %s16, 1
        %s205 = scalar_select %p204, %s16, 1
        %p206 = scmp.lt.s32.totalorder %s19, 0
        %s207 = scalar_select %p206, %s19, 0
        %p208 = scmp.lt.s32.totalorder %s17, 0
        %s209 = scalar_select %p208, %s17, 0
        %s210 = sadd.s32 %s209, %s207
        %s211 = sadd.s32 %s210, %s205
        %s212 = sadd.s32 %s211, 4
        %s213 = smul.addr %s212, 8
        %s214 = scalar_lea.vmem %s2, %s213
      $region28: #{flash_attention_forward.4} parent=15 // pred_fallthru
        _
    $region16: #{flash_attention_forward.4} parent=5 // pred_fallthru
      _
    %p215 = scmp.le.s32.totalorder 1, %s9
    %p216 = scmp.lt.s32.totalorder %s9, 3
    %p217 = pnand %p215, %p216
    %p218 = pneg %p217
    // Predicated region
    $region29: #{flash_attention_forward.4} parent=5 // pred_check
      _
    $region30: #{flash_attention_forward.4} parent=5 // pred_check_branch
      %220 = sbr.rel (%p217) target = $region32
    $region31: #{flash_attention_forward.4} parent=5 // pred_region
      %s221 = ssub.s32 %s9, 1
      %p222 = scmp.lt.s32.totalorder %s20, 1
      %s223 = scalar_select %p222, %s20, 1
      %p224 = scmp.lt.s32.totalorder %s22, 0
      %s225 = scalar_select %p224, %s22, 0
      %p226 = scmp.lt.s32.totalorder %s21, 0
      %s227 = scalar_select %p226, %s21, 0
      %s228 = sadd.s32 %s227, %s225
      %s229 = sadd.s32 %s228, %s223
      %s230 = smul.addr %s229, 8
      %s231 = scalar_lea.vmem %s0, %s230
      %p232 = pneg %p65
      %p233 = pneg %p62
      %p234 = scmp.lt.s32.totalorder %s20, 1
      %s235 = scalar_select %p234, %s20, 1
      %p236 = scmp.lt.s32.totalorder %s23, 0
      %s237 = scalar_select %p236, %s23, 0
      %p238 = scmp.lt.s32.totalorder %s21, 0
      %s239 = scalar_select %p238, %s21, 0
      %s240 = sadd.s32 %s239, %s237
      %s241 = sadd.s32 %s240, %s235
      %s242 = sadd.s32 %s241, 2
      %s243 = smul.addr %s242, 8
      %s244 = scalar_lea.vmem %s1, %s243
      %p245 = pneg %p95
      %p246 = pneg %p92
      %p247 = scmp.lt.s32.totalorder %s20, 1
      %s248 = scalar_select %p247, %s20, 1
      %p249 = scmp.lt.s32.totalorder %s23, 0
      %s250 = scalar_select %p249, %s23, 0
      %p251 = scmp.lt.s32.totalorder %s21, 0
      %s252 = scalar_select %p251, %s21, 0
      %s253 = sadd.s32 %s252, %s250
      %s254 = sadd.s32 %s253, %s248
      %s255 = sadd.s32 %s254, 4
      %s256 = smul.addr %s255, 8
      %s257 = scalar_lea.vmem %s2, %s256
      %p258 = pneg %p125
      %p259 = pneg %p122
      %p260 = pneg %p155
      %p261 = pneg %p152
      %p262 = scmp.lt.s32.totalorder %s20, 1
      %s263 = scalar_select %p262, %s20, 1
      %p264 = scmp.lt.s32.totalorder %s22, 0
      %s265 = scalar_select %p264, %s22, 0
      %p266 = scmp.lt.s32.totalorder %s21, 0
      %s267 = scalar_select %p266, %s21, 0
      %s268 = sadd.s32 %s267, %s265
      %s269 = sadd.s32 %s268, %s263
      %s270 = smul.addr %s269, 8
      %s271 = scalar_lea.vmem %s3, %s270
      %p272 = scmp.lt.s32.totalorder %s20, 1
      %s273 = scalar_select %p272, %s20, 1
      %p274 = scmp.lt.s32.totalorder %s22, 0
      %s275 = scalar_select %p274, %s22, 0
      %p276 = scmp.lt.s32.totalorder %s21, 0
      %s277 = scalar_select %p276, %s21, 0
      %s278 = sadd.s32 %s277, %s275
      %s279 = sadd.s32 %s278, %s273
      %s280 = smul.addr %s279, 8
      %s281 = scalar_lea.vmem %s0, %s280
      %p282 = scmp.lt.s32.totalorder %s20, 1
      %s283 = scalar_select %p282, %s20, 1
      %p284 = scmp.lt.s32.totalorder %s23, 0
      %s285 = scalar_select %p284, %s23, 0
      %p286 = scmp.lt.s32.totalorder %s21, 0
      %s287 = scalar_select %p286, %s21, 0
      %s288 = sadd.s32 %s287, %s285
      %s289 = sadd.s32 %s288, %s283
      %s290 = sadd.s32 %s289, 2
      %s291 = smul.addr %s290, 8
      %s292 = scalar_lea.vmem %s1, %s291
      %p293 = scmp.lt.s32.totalorder %s20, 1
      %s294 = scalar_select %p293, %s20, 1
      %p295 = scmp.lt.s32.totalorder %s23, 0
      %s296 = scalar_select %p295, %s23, 0
      %p297 = scmp.lt.s32.totalorder %s21, 0
      %s298 = scalar_select %p297, %s21, 0
      %s299 = sadd.s32 %s298, %s296
      %s300 = sadd.s32 %s299, %s294
      %s301 = sadd.s32 %s300, 4
      %s302 = smul.addr %s301, 8
      %s303 = scalar_lea.vmem %s2, %s302
      %p304 = scmp.lt.s32.totalorder %s20, 1
      %s305 = scalar_select %p304, %s20, 1
      %p306 = scmp.lt.s32.totalorder %s22, 0
      %s307 = scalar_select %p306, %s22, 0
      %p308 = scmp.lt.s32.totalorder %s21, 0
      %s309 = scalar_select %p308, %s21, 0
      %s310 = sadd.s32 %s309, %s307
      %s311 = sadd.s32 %s310, %s305
      %s312 = smul.addr %s311, 8
      %s313 = scalar_lea.vmem %s3, %s312
      %p314 = scmp.eq.s32.totalorder %s23, 0
      // Predicated region
      $region33: #{flash_attention_forward.4} parent=31 // pred_check
        %p315 = pneg %p314
      $region34: #{flash_attention_forward.4} parent=31 // pred_check_branch
        %317 = sbr.rel (%p315) target = $region36
      $region35: #{flash_attention_forward.4} parent=31 // pred_region
        %vm318 = vcmask 31744
        %319 = vst.msk [vmem:[#allocation2] sm:$0xff] %vm318, -inf
        %320 = vst.msk [vmem:[#allocation3] sm:$0xff] %vm318, 0.0
        %vm321 = vcmask 261120
        %322 = vst.msk [vmem:[#allocation4] sm:$0xff] %vm321, 0.0
      $region36: #{flash_attention_forward.4} parent=31 // pred_fallthru
        _
      %v323 = vld [vmem:[%s281] sm:$0xff]
      %v324 = vmul.f32 %v323, 0.35355338
      %v325 = vld [vmem:[%s292] sm:$0xff]
      %v326 = vld [vmem:[%s303] sm:$0xff]
      %vm327 = vcmask 64512
      %v329 = vsel %vm327, %v324, 0
      %v332 = vsel %vm327, %v325, 0
      %334 = vmatprep.subr.mxu0 0.0
      %335 = vmatpush1.xpose.msra.mxu0 0.0
      %336 = vmatprep.subr.mxu0 0.0
      %337 = vmatpush1.xpose.msra.mxu0 0.0
      %338 = vmatprep.subr.mxu0 0.0
      %339 = vmatpush1.xpose.msra.mxu0 0.0
      %340 = vmatprep.subr.mxu0 0.0
      %341 = vmatpush1.xpose.msra.mxu0 0.0
      %342 = vmatprep.subr.mxu0 0.0
      %343 = vmatpush1.xpose.msra.mxu0 0.0
      %344 = vmatprep.subr.mxu0 0.0
      %345 = vmatpush1.xpose.msra.mxu0 0.0
      %346 = vmatprep.subr.mxu0 0.0
      %347 = vmatpush1.xpose.msra.mxu0 0.0
      %348 = vmatprep.subr.mxu0 0.0
      %349 = vmatpush1.xpose.msra.mxu0 0.0
      %350 = vmatprep.subr.mxu0 0.0
      %351 = vmatpush1.xpose.msra.mxu0 0.0
      %352 = vmatprep.subr.mxu0 0.0
      %353 = vmatpush1.xpose.msra.mxu0 0.0
      %354 = vmatprep.subr.mxu0 0.0
      %355 = vmatpush1.xpose.msra.mxu0 0.0
      %356 = vmatprep.subr.mxu0 0.0
      %357 = vmatpush1.xpose.msra.mxu0 0.0
      %358 = vmatprep.subr.mxu0 0.0
      %359 = vmatpush1.xpose.msra.mxu0 0.0
      %360 = vmatprep.subr.mxu0 0.0
      %361 = vmatpush1.xpose.msra.mxu0 0.0
      %362 = vmatprep.subr.mxu0 0.0
      %363 = vmatpush1.xpose.msra.mxu0 0.0
      %364 = vmatprep.subr.mxu0 0.0
      %365 = vmatpush1.xpose.msra.mxu0 %v332
      %366 = vmatprep.subr.mxu0 0.0
      %367 = vmatpush2.xpose.msra.mxu0 0.0
      %368 = vmatprep.subr.mxu0 0.0
      %369 = vmatpush2.xpose.msra.mxu0 0.0
      %370 = vmatprep.subr.mxu0 0.0
      %371 = vmatpush2.xpose.msra.mxu0 0.0
      %372 = vmatprep.subr.mxu0 0.0
      %373 = vmatpush2.xpose.msra.mxu0 0.0
      %374 = vmatprep.subr.mxu0 0.0
      %375 = vmatpush2.xpose.msra.mxu0 0.0
      %376 = vmatprep.subr.mxu0 0.0
      %377 = vmatpush2.xpose.msra.mxu0 0.0
      %378 = vmatprep.subr.mxu0 0.0
      %379 = vmatpush2.xpose.msra.mxu0 0.0
      %380 = vmatprep.subr.mxu0 0.0
      %381 = vmatpush2.xpose.msra.mxu0 0.0
      %382 = vmatprep.subr.mxu0 0.0
      %383 = vmatpush2.xpose.msra.mxu0 0.0
      %384 = vmatprep.subr.mxu0 0.0
      %385 = vmatpush2.xpose.msra.mxu0 0.0
      %386 = vmatprep.subr.mxu0 0.0
      %387 = vmatpush2.xpose.msra.mxu0 0.0
      %388 = vmatprep.subr.mxu0 0.0
      %389 = vmatpush2.xpose.msra.mxu0 0.0
      %390 = vmatprep.subr.mxu0 0.0
      %391 = vmatpush2.xpose.msra.mxu0 0.0
      %392 = vmatprep.subr.mxu0 0.0
      %393 = vmatpush2.xpose.msra.mxu0 0.0
      %394 = vmatprep.subr.mxu0 0.0
      %395 = vmatpush2.xpose.msra.mxu0 0.0
      %396 = vmatprep.subr.mxu0 0.0
      %397 = vmatpush2.xpose.msra.mxu0 0.0
      %398 = vmatprep.mubr.f32.mxu0 0.0
      %399 = vmatmul.mubr.f32.gmra.mxu0 %v329
      %v400 = vpop.f32.mrf.mxu0
      %v401 = vadd.f32 0.0, %v400
      %v402 = vpop.f32.mrf.mxu0
      %403 = vdwg.mxu0
      %v404 = vld [vmem:[#allocation2] sm:$0xff]
      %v405 = vsel %vm327, %v401, -inf
      %406 = vmax.xlane.f32.xlu0 %v405
      %v407 = vpop.xlane.xlu0 %406
      %v408 = vmax.f32 %v404, %v407
      %v409 = vsub.f32 %v404, %v408
      %v410 = vmul.f32 %v409, 1.442695
      %v411 = vpow.pop %v410
      %413 = vset.pattern.permute.xlu0 0
      %414 = vperm.xlu0 %413, %v408
      %v415 = vpop.permute.xlu0 %414
      %v417 = vsub.f32 %v401, %v415
      %v418 = vmul.f32 %v417, 1.442695
      %v419 = vpow.pop %v418
      %v420 = vld [vmem:[#allocation3] sm:$0xff]
      %v421 = vmul.f32 %v411, %v420
      %v422 = vsel %vm327, %v419, 0.0
      %423 = vadd.xlane.f32.xlu0 %v422
      %v424 = vpop.xlane.xlu0 %423
      %v425 = vadd.f32 %v421, %v424
      %vm426 = vcmask 7168
      %427 = vst.msk [vmem:[#allocation3] sm:$0xff] %vm426, %v425
      %v428 = vld [vmem:[#allocation4] sm:$0xff]
      %430 = vset.pattern.permute.xlu0 0
      %431 = vperm.xlu0 %430, %v411
      %v432 = vpop.permute.xlu0 %431
      %v434 = vmul.f32 %v432, %v428
      %v436 = vsel %vm327, %v419, 0
      %438 = vmatprep.subr.mxu0 0.0
      %439 = vmatpush1.msra.mxu0 0.0
      %440 = vmatprep.subr.mxu0 0.0
      %441 = vmatpush1.msra.mxu0 0.0
      %442 = vmatprep.subr.mxu0 0.0
      %443 = vmatpush1.msra.mxu0 0.0
      %444 = vmatprep.subr.mxu0 0.0
      %445 = vmatpush1.msra.mxu0 0.0
      %446 = vmatprep.subr.mxu0 0.0
      %447 = vmatpush1.msra.mxu0 0.0
      %448 = vmatprep.subr.mxu0 0.0
      %449 = vmatpush1.msra.mxu0 0.0
      %450 = vmatprep.subr.mxu0 0.0
      %451 = vmatpush1.msra.mxu0 0.0
      %452 = vmatprep.subr.mxu0 0.0
      %453 = vmatpush1.msra.mxu0 0.0
      %454 = vmatprep.subr.mxu0 0.0
      %455 = vmatpush1.msra.mxu0 0.0
      %456 = vmatprep.subr.mxu0 0.0
      %457 = vmatpush1.msra.mxu0 0.0
      %458 = vmatprep.subr.mxu0 0.0
      %459 = vmatpush1.msra.mxu0 0.0
      %460 = vmatprep.subr.mxu0 0.0
      %461 = vmatpush1.msra.mxu0 0.0
      %462 = vmatprep.subr.mxu0 0.0
      %463 = vmatpush1.msra.mxu0 0.0
      %464 = vmatprep.subr.mxu0 0.0
      %465 = vmatpush1.msra.mxu0 0.0
      %466 = vmatprep.subr.mxu0 0.0
      %467 = vmatpush1.msra.mxu0 0.0
      %468 = vmatprep.subr.mxu0 0.0
      %469 = vmatpush1.msra.mxu0 %v326
      %470 = vmatprep.subr.mxu0 0.0
      %471 = vmatpush2.msra.mxu0 0.0
      %472 = vmatprep.subr.mxu0 0.0
      %473 = vmatpush2.msra.mxu0 0.0
      %474 = vmatprep.subr.mxu0 0.0
      %475 = vmatpush2.msra.mxu0 0.0
      %476 = vmatprep.subr.mxu0 0.0
      %477 = vmatpush2.msra.mxu0 0.0
      %478 = vmatprep.subr.mxu0 0.0
      %479 = vmatpush2.msra.mxu0 0.0
      %480 = vmatprep.subr.mxu0 0.0
      %481 = vmatpush2.msra.mxu0 0.0
      %482 = vmatprep.subr.mxu0 0.0
      %483 = vmatpush2.msra.mxu0 0.0
      %484 = vmatprep.subr.mxu0 0.0
      %485 = vmatpush2.msra.mxu0 0.0
      %486 = vmatprep.subr.mxu0 0.0
      %487 = vmatpush2.msra.mxu0 0.0
      %488 = vmatprep.subr.mxu0 0.0
      %489 = vmatpush2.msra.mxu0 0.0
      %490 = vmatprep.subr.mxu0 0.0
      %491 = vmatpush2.msra.mxu0 0.0
      %492 = vmatprep.subr.mxu0 0.0
      %493 = vmatpush2.msra.mxu0 0.0
      %494 = vmatprep.subr.mxu0 0.0
      %495 = vmatpush2.msra.mxu0 0.0
      %496 = vmatprep.subr.mxu0 0.0
      %497 = vmatpush2.msra.mxu0 0.0
      %498 = vmatprep.subr.mxu0 0.0
      %499 = vmatpush2.msra.mxu0 0.0
      %500 = vmatprep.subr.mxu0 0.0
      %501 = vmatpush2.msra.mxu0 0.0
      %502 = vmatprep.mubr.f32.mxu0 0.0
      %503 = vmatmul.mubr.f32.gmra.mxu0 %v436
      %v504 = vpop.f32.mrf.mxu0
      %v505 = vadd.f32 0.0, %v504
      %v506 = vpop.f32.mrf.mxu0
      %507 = vdwg.mxu0
      %v508 = vadd.f32 %v434, %v505
      %509 = vst.msk [vmem:[#allocation4] sm:$0xff] %vm327, %v508
      %510 = vst.msk [vmem:[#allocation2] sm:$0xff] %vm426, %v408
      %v511 = vld [vmem:[%s281] sm:$0xff]
      %v512 = vmul.f32 %v511, 0.35355338
      %v513 = vld [vmem:[%s292] sm:$0xff]
      %v514 = vld [vmem:[%s303] sm:$0xff]
      %516 = vrot.lane.b32.xlu0 %v512, 120
      %v517 = vpop.permute.xlu0 %516
      %519 = vrot.lane.b32.xlu0 %v513, 120
      %v520 = vpop.permute.xlu0 %519
      %v521 = vsel %vm327, %v517, 0
      %v523 = vsel %vm327, %v520, 0
      %525 = vmatprep.subr.mxu0 0.0
      %526 = vmatpush1.xpose.msra.mxu0 0.0
      %527 = vmatprep.subr.mxu0 0.0
      %528 = vmatpush1.xpose.msra.mxu0 0.0
      %529 = vmatprep.subr.mxu0 0.0
      %530 = vmatpush1.xpose.msra.mxu0 0.0
      %531 = vmatprep.subr.mxu0 0.0
      %532 = vmatpush1.xpose.msra.mxu0 0.0
      %533 = vmatprep.subr.mxu0 0.0
      %534 = vmatpush1.xpose.msra.mxu0 0.0
      %535 = vmatprep.subr.mxu0 0.0
      %536 = vmatpush1.xpose.msra.mxu0 0.0
      %537 = vmatprep.subr.mxu0 0.0
      %538 = vmatpush1.xpose.msra.mxu0 0.0
      %539 = vmatprep.subr.mxu0 0.0
      %540 = vmatpush1.xpose.msra.mxu0 0.0
      %541 = vmatprep.subr.mxu0 0.0
      %542 = vmatpush1.xpose.msra.mxu0 0.0
      %543 = vmatprep.subr.mxu0 0.0
      %544 = vmatpush1.xpose.msra.mxu0 0.0
      %545 = vmatprep.subr.mxu0 0.0
      %546 = vmatpush1.xpose.msra.mxu0 0.0
      %547 = vmatprep.subr.mxu0 0.0
      %548 = vmatpush1.xpose.msra.mxu0 0.0
      %549 = vmatprep.subr.mxu0 0.0
      %550 = vmatpush1.xpose.msra.mxu0 0.0
      %551 = vmatprep.subr.mxu0 0.0
      %552 = vmatpush1.xpose.msra.mxu0 0.0
      %553 = vmatprep.subr.mxu0 0.0
      %554 = vmatpush1.xpose.msra.mxu0 0.0
      %555 = vmatprep.subr.mxu0 0.0
      %556 = vmatpush1.xpose.msra.mxu0 %v523
      %557 = vmatprep.subr.mxu0 0.0
      %558 = vmatpush2.xpose.msra.mxu0 0.0
      %559 = vmatprep.subr.mxu0 0.0
      %560 = vmatpush2.xpose.msra.mxu0 0.0
      %561 = vmatprep.subr.mxu0 0.0
      %562 = vmatpush2.xpose.msra.mxu0 0.0
      %563 = vmatprep.subr.mxu0 0.0
      %564 = vmatpush2.xpose.msra.mxu0 0.0
      %565 = vmatprep.subr.mxu0 0.0
      %566 = vmatpush2.xpose.msra.mxu0 0.0
      %567 = vmatprep.subr.mxu0 0.0
      %568 = vmatpush2.xpose.msra.mxu0 0.0
      %569 = vmatprep.subr.mxu0 0.0
      %570 = vmatpush2.xpose.msra.mxu0 0.0
      %571 = vmatprep.subr.mxu0 0.0
      %572 = vmatpush2.xpose.msra.mxu0 0.0
      %573 = vmatprep.subr.mxu0 0.0
      %574 = vmatpush2.xpose.msra.mxu0 0.0
      %575 = vmatprep.subr.mxu0 0.0
      %576 = vmatpush2.xpose.msra.mxu0 0.0
      %577 = vmatprep.subr.mxu0 0.0
      %578 = vmatpush2.xpose.msra.mxu0 0.0
      %579 = vmatprep.subr.mxu0 0.0
      %580 = vmatpush2.xpose.msra.mxu0 0.0
      %581 = vmatprep.subr.mxu0 0.0
      %582 = vmatpush2.xpose.msra.mxu0 0.0
      %583 = vmatprep.subr.mxu0 0.0
      %584 = vmatpush2.xpose.msra.mxu0 0.0
      %585 = vmatprep.subr.mxu0 0.0
      %586 = vmatpush2.xpose.msra.mxu0 0.0
      %587 = vmatprep.subr.mxu0 0.0
      %588 = vmatpush2.xpose.msra.mxu0 0.0
      %589 = vmatprep.mubr.f32.mxu0 0.0
      %590 = vmatmul.mubr.f32.gmra.mxu0 %v521
      %v591 = vpop.f32.mrf.mxu0
      %v592 = vadd.f32 0.0, %v591
      %v593 = vpop.f32.mrf.mxu0
      %594 = vdwg.mxu0
      %v595 = vld [vmem:[#allocation2] sm:$0xff]
      %v596 = vsel %vm327, %v592, -inf
      %597 = vmax.xlane.f32.xlu0 %v596
      %v598 = vpop.xlane.xlu0 %597
      %v599 = vmax.f32 %v595, %v598
      %v600 = vsub.f32 %v595, %v599
      %v601 = vmul.f32 %v600, 1.442695
      %v602 = vpow.pop %v601
      %604 = vset.pattern.permute.xlu0 1
      %605 = vperm.xlu0 %604, %v599
      %v606 = vpop.permute.xlu0 %605
      %v608 = vsub.f32 %v592, %v606
      %v609 = vmul.f32 %v608, 1.442695
      %v610 = vpow.pop %v609
      %v611 = vld [vmem:[#allocation3] sm:$0xff]
      %v612 = vmul.f32 %v602, %v611
      %v613 = vsel %vm327, %v610, 0.0
      %614 = vadd.xlane.f32.xlu0 %v613
      %v615 = vpop.xlane.xlu0 %614
      %v616 = vadd.f32 %v612, %v615
      %vm617 = vcmask 15368
      %618 = vst.msk [vmem:[#allocation3] sm:$0xff] %vm617, %v616
      %v619 = vld [vmem:[#allocation4] sm:$0xff]
      %621 = vset.pattern.permute.xlu0 1
      %622 = vperm.xlu0 %621, %v602
      %v623 = vpop.permute.xlu0 %622
      %v625 = vmul.f32 %v623, %v619
      %627 = vrot.lane.b32.xlu0 %v514, 120
      %v628 = vpop.permute.xlu0 %627
      %v631 = vsel %vm327, %v610, 0
      %633 = vmatprep.subr.mxu0 0.0
      %634 = vmatpush1.msra.mxu0 0.0
      %635 = vmatprep.subr.mxu0 0.0
      %636 = vmatpush1.msra.mxu0 0.0
      %637 = vmatprep.subr.mxu0 0.0
      %638 = vmatpush1.msra.mxu0 0.0
      %639 = vmatprep.subr.mxu0 0.0
      %640 = vmatpush1.msra.mxu0 0.0
      %641 = vmatprep.subr.mxu0 0.0
      %642 = vmatpush1.msra.mxu0 0.0
      %643 = vmatprep.subr.mxu0 0.0
      %644 = vmatpush1.msra.mxu0 0.0
      %645 = vmatprep.subr.mxu0 0.0
      %646 = vmatpush1.msra.mxu0 0.0
      %647 = vmatprep.subr.mxu0 0.0
      %648 = vmatpush1.msra.mxu0 0.0
      %649 = vmatprep.subr.mxu0 0.0
      %650 = vmatpush1.msra.mxu0 0.0
      %651 = vmatprep.subr.mxu0 0.0
      %652 = vmatpush1.msra.mxu0 0.0
      %653 = vmatprep.subr.mxu0 0.0
      %654 = vmatpush1.msra.mxu0 0.0
      %655 = vmatprep.subr.mxu0 0.0
      %656 = vmatpush1.msra.mxu0 0.0
      %657 = vmatprep.subr.mxu0 0.0
      %658 = vmatpush1.msra.mxu0 0.0
      %659 = vmatprep.subr.mxu0 0.0
      %660 = vmatpush1.msra.mxu0 0.0
      %661 = vmatprep.subr.mxu0 0.0
      %662 = vmatpush1.msra.mxu0 0.0
      %663 = vmatprep.subr.mxu0 0.0
      %664 = vmatpush1.msra.mxu0 %v628
      %665 = vmatprep.subr.mxu0 0.0
      %666 = vmatpush2.msra.mxu0 0.0
      %667 = vmatprep.subr.mxu0 0.0
      %668 = vmatpush2.msra.mxu0 0.0
      %669 = vmatprep.subr.mxu0 0.0
      %670 = vmatpush2.msra.mxu0 0.0
      %671 = vmatprep.subr.mxu0 0.0
      %672 = vmatpush2.msra.mxu0 0.0
      %673 = vmatprep.subr.mxu0 0.0
      %674 = vmatpush2.msra.mxu0 0.0
      %675 = vmatprep.subr.mxu0 0.0
      %676 = vmatpush2.msra.mxu0 0.0
      %677 = vmatprep.subr.mxu0 0.0
      %678 = vmatpush2.msra.mxu0 0.0
      %679 = vmatprep.subr.mxu0 0.0
      %680 = vmatpush2.msra.mxu0 0.0
      %681 = vmatprep.subr.mxu0 0.0
      %682 = vmatpush2.msra.mxu0 0.0
      %683 = vmatprep.subr.mxu0 0.0
      %684 = vmatpush2.msra.mxu0 0.0
      %685 = vmatprep.subr.mxu0 0.0
      %686 = vmatpush2.msra.mxu0 0.0
      %687 = vmatprep.subr.mxu0 0.0
      %688 = vmatpush2.msra.mxu0 0.0
      %689 = vmatprep.subr.mxu0 0.0
      %690 = vmatpush2.msra.mxu0 0.0
      %691 = vmatprep.subr.mxu0 0.0
      %692 = vmatpush2.msra.mxu0 0.0
      %693 = vmatprep.subr.mxu0 0.0
      %694 = vmatpush2.msra.mxu0 0.0
      %695 = vmatprep.subr.mxu0 0.0
      %696 = vmatpush2.msra.mxu0 0.0
      %697 = vmatprep.mubr.f32.mxu0 0.0
      %698 = vmatmul.mubr.f32.gmra.mxu0 %v631
      %v699 = vpop.f32.mrf.mxu0
      %v700 = vadd.f32 0.0, %v699
      %v701 = vpop.f32.mrf.mxu0
      %702 = vdwg.mxu0
      %704 = vrot.lane.b32.xlu0 %v700, 8
      %v705 = vpop.permute.xlu0 %704
      %v707 = vadd.f32 %v625, %v705
      %vm708 = vcmask 130112
      %709 = vst.msk [vmem:[#allocation4] sm:$0xff] %vm708, %v707
      %710 = vst.msk [vmem:[#allocation2] sm:$0xff] %vm617, %v599
      %v711 = vld [vmem:[%s281] sm:$0xff]
      %v712 = vmul.f32 %v711, 0.35355338
      %v713 = vld [vmem:[%s292] sm:$0xff]
      %v714 = vld [vmem:[%s303] sm:$0xff]
      %716 = vrot.lane.b32.xlu0 %v712, 112
      %v717 = vpop.permute.xlu0 %716
      %719 = vrot.lane.b32.xlu0 %v713, 112
      %v720 = vpop.permute.xlu0 %719
      %v721 = vsel %vm327, %v717, 0
      %v723 = vsel %vm327, %v720, 0
      %725 = vmatprep.subr.mxu0 0.0
      %726 = vmatpush1.xpose.msra.mxu0 0.0
      %727 = vmatprep.subr.mxu0 0.0
      %728 = vmatpush1.xpose.msra.mxu0 0.0
      %729 = vmatprep.subr.mxu0 0.0
      %730 = vmatpush1.xpose.msra.mxu0 0.0
      %731 = vmatprep.subr.mxu0 0.0
      %732 = vmatpush1.xpose.msra.mxu0 0.0
      %733 = vmatprep.subr.mxu0 0.0
      %734 = vmatpush1.xpose.msra.mxu0 0.0
      %735 = vmatprep.subr.mxu0 0.0
      %736 = vmatpush1.xpose.msra.mxu0 0.0
      %737 = vmatprep.subr.mxu0 0.0
      %738 = vmatpush1.xpose.msra.mxu0 0.0
      %739 = vmatprep.subr.mxu0 0.0
      %740 = vmatpush1.xpose.msra.mxu0 0.0
      %741 = vmatprep.subr.mxu0 0.0
      %742 = vmatpush1.xpose.msra.mxu0 0.0
      %743 = vmatprep.subr.mxu0 0.0
      %744 = vmatpush1.xpose.msra.mxu0 0.0
      %745 = vmatprep.subr.mxu0 0.0
      %746 = vmatpush1.xpose.msra.mxu0 0.0
      %747 = vmatprep.subr.mxu0 0.0
      %748 = vmatpush1.xpose.msra.mxu0 0.0
      %749 = vmatprep.subr.mxu0 0.0
      %750 = vmatpush1.xpose.msra.mxu0 0.0
      %751 = vmatprep.subr.mxu0 0.0
      %752 = vmatpush1.xpose.msra.mxu0 0.0
      %753 = vmatprep.subr.mxu0 0.0
      %754 = vmatpush1.xpose.msra.mxu0 0.0
      %755 = vmatprep.subr.mxu0 0.0
      %756 = vmatpush1.xpose.msra.mxu0 %v723
      %757 = vmatprep.subr.mxu0 0.0
      %758 = vmatpush2.xpose.msra.mxu0 0.0
      %759 = vmatprep.subr.mxu0 0.0
      %760 = vmatpush2.xpose.msra.mxu0 0.0
      %761 = vmatprep.subr.mxu0 0.0
      %762 = vmatpush2.xpose.msra.mxu0 0.0
      %763 = vmatprep.subr.mxu0 0.0
      %764 = vmatpush2.xpose.msra.mxu0 0.0
      %765 = vmatprep.subr.mxu0 0.0
      %766 = vmatpush2.xpose.msra.mxu0 0.0
      %767 = vmatprep.subr.mxu0 0.0
      %768 = vmatpush2.xpose.msra.mxu0 0.0
      %769 = vmatprep.subr.mxu0 0.0
      %770 = vmatpush2.xpose.msra.mxu0 0.0
      %771 = vmatprep.subr.mxu0 0.0
      %772 = vmatpush2.xpose.msra.mxu0 0.0
      %773 = vmatprep.subr.mxu0 0.0
      %774 = vmatpush2.xpose.msra.mxu0 0.0
      %775 = vmatprep.subr.mxu0 0.0
      %776 = vmatpush2.xpose.msra.mxu0 0.0
      %777 = vmatprep.subr.mxu0 0.0
      %778 = vmatpush2.xpose.msra.mxu0 0.0
      %779 = vmatprep.subr.mxu0 0.0
      %780 = vmatpush2.xpose.msra.mxu0 0.0
      %781 = vmatprep.subr.mxu0 0.0
      %782 = vmatpush2.xpose.msra.mxu0 0.0
      %783 = vmatprep.subr.mxu0 0.0
      %784 = vmatpush2.xpose.msra.mxu0 0.0
      %785 = vmatprep.subr.mxu0 0.0
      %786 = vmatpush2.xpose.msra.mxu0 0.0
      %787 = vmatprep.subr.mxu0 0.0
      %788 = vmatpush2.xpose.msra.mxu0 0.0
      %789 = vmatprep.mubr.f32.mxu0 0.0
      %790 = vmatmul.mubr.f32.gmra.mxu0 %v721
      %v791 = vpop.f32.mrf.mxu0
      %v792 = vadd.f32 0.0, %v791
      %v793 = vpop.f32.mrf.mxu0
      %794 = vdwg.mxu0
      %v795 = vld [vmem:[#allocation2] sm:$0xff]
      %v796 = vsel %vm327, %v792, -inf
      %797 = vmax.xlane.f32.xlu0 %v796
      %v798 = vpop.xlane.xlu0 %797
      %v799 = vmax.f32 %v795, %v798
      %v800 = vsub.f32 %v795, %v799
      %v801 = vmul.f32 %v800, 1.442695
      %v802 = vpow.pop %v801
      %804 = vset.pattern.permute.xlu0 2
      %805 = vperm.xlu0 %804, %v799
      %v806 = vpop.permute.xlu0 %805
      %v808 = vsub.f32 %v792, %v806
      %v809 = vmul.f32 %v808, 1.442695
      %v810 = vpow.pop %v809
      %v811 = vld [vmem:[#allocation3] sm:$0xff]
      %v812 = vmul.f32 %v802, %v811
      %v813 = vsel %vm327, %v810, 0.0
      %814 = vadd.xlane.f32.xlu0 %v813
      %v815 = vpop.xlane.xlu0 %814
      %v816 = vadd.f32 %v812, %v815
      %vm817 = vcmask 23568
      %818 = vst.msk [vmem:[#allocation3] sm:$0xff] %vm817, %v816
      %v819 = vld [vmem:[#allocation4] sm:$0xff]
      %821 = vset.pattern.permute.xlu0 2
      %822 = vperm.xlu0 %821, %v802
      %v823 = vpop.permute.xlu0 %822
      %v825 = vmul.f32 %v823, %v819
      %827 = vrot.lane.b32.xlu0 %v714, 112
      %v828 = vpop.permute.xlu0 %827
      %v831 = vsel %vm327, %v810, 0
      %833 = vmatprep.subr.mxu0 0.0
      %834 = vmatpush1.msra.mxu0 0.0
      %835 = vmatprep.subr.mxu0 0.0
      %836 = vmatpush1.msra.mxu0 0.0
      %837 = vmatprep.subr.mxu0 0.0
      %838 = vmatpush1.msra.mxu0 0.0
      %839 = vmatprep.subr.mxu0 0.0
      %840 = vmatpush1.msra.mxu0 0.0
      %841 = vmatprep.subr.mxu0 0.0
      %842 = vmatpush1.msra.mxu0 0.0
      %843 = vmatprep.subr.mxu0 0.0
      %844 = vmatpush1.msra.mxu0 0.0
      %845 = vmatprep.subr.mxu0 0.0
      %846 = vmatpush1.msra.mxu0 0.0
      %847 = vmatprep.subr.mxu0 0.0
      %848 = vmatpush1.msra.mxu0 0.0
      %849 = vmatprep.subr.mxu0 0.0
      %850 = vmatpush1.msra.mxu0 0.0
      %851 = vmatprep.subr.mxu0 0.0
      %852 = vmatpush1.msra.mxu0 0.0
      %853 = vmatprep.subr.mxu0 0.0
      %854 = vmatpush1.msra.mxu0 0.0
      %855 = vmatprep.subr.mxu0 0.0
      %856 = vmatpush1.msra.mxu0 0.0
      %857 = vmatprep.subr.mxu0 0.0
      %858 = vmatpush1.msra.mxu0 0.0
      %859 = vmatprep.subr.mxu0 0.0
      %860 = vmatpush1.msra.mxu0 0.0
      %861 = vmatprep.subr.mxu0 0.0
      %862 = vmatpush1.msra.mxu0 0.0
      %863 = vmatprep.subr.mxu0 0.0
      %864 = vmatpush1.msra.mxu0 %v828
      %865 = vmatprep.subr.mxu0 0.0
      %866 = vmatpush2.msra.mxu0 0.0
      %867 = vmatprep.subr.mxu0 0.0
      %868 = vmatpush2.msra.mxu0 0.0
      %869 = vmatprep.subr.mxu0 0.0
      %870 = vmatpush2.msra.mxu0 0.0
      %871 = vmatprep.subr.mxu0 0.0
      %872 = vmatpush2.msra.mxu0 0.0
      %873 = vmatprep.subr.mxu0 0.0
      %874 = vmatpush2.msra.mxu0 0.0
      %875 = vmatprep.subr.mxu0 0.0
      %876 = vmatpush2.msra.mxu0 0.0
      %877 = vmatprep.subr.mxu0 0.0
      %878 = vmatpush2.msra.mxu0 0.0
      %879 = vmatprep.subr.mxu0 0.0
      %880 = vmatpush2.msra.mxu0 0.0
      %881 = vmatprep.subr.mxu0 0.0
      %882 = vmatpush2.msra.mxu0 0.0
      %883 = vmatprep.subr.mxu0 0.0
      %884 = vmatpush2.msra.mxu0 0.0
      %885 = vmatprep.subr.mxu0 0.0
      %886 = vmatpush2.msra.mxu0 0.0
      %887 = vmatprep.subr.mxu0 0.0
      %888 = vmatpush2.msra.mxu0 0.0
      %889 = vmatprep.subr.mxu0 0.0
      %890 = vmatpush2.msra.mxu0 0.0
      %891 = vmatprep.subr.mxu0 0.0
      %892 = vmatpush2.msra.mxu0 0.0
      %893 = vmatprep.subr.mxu0 0.0
      %894 = vmatpush2.msra.mxu0 0.0
      %895 = vmatprep.subr.mxu0 0.0
      %896 = vmatpush2.msra.mxu0 0.0
      %897 = vmatprep.mubr.f32.mxu0 0.0
      %898 = vmatmul.mubr.f32.gmra.mxu0 %v831
      %v899 = vpop.f32.mrf.mxu0
      %v900 = vadd.f32 0.0, %v899
      %v901 = vpop.f32.mrf.mxu0
      %902 = vdwg.mxu0
      %904 = vrot.lane.b32.xlu0 %v900, 16
      %v905 = vpop.permute.xlu0 %904
      %v907 = vadd.f32 %v825, %v905
      %vm908 = vcmask 195712
      %909 = vst.msk [vmem:[#allocation4] sm:$0xff] %vm908, %v907
      %910 = vst.msk [vmem:[#allocation2] sm:$0xff] %vm817, %v799
      %v911 = vld [vmem:[%s281] sm:$0xff]
      %v912 = vmul.f32 %v911, 0.35355338
      %v913 = vld [vmem:[%s292] sm:$0xff]
      %v914 = vld [vmem:[%s303] sm:$0xff]
      %916 = vrot.lane.b32.xlu0 %v912, 104
      %v917 = vpop.permute.xlu0 %916
      %919 = vrot.lane.b32.xlu0 %v913, 104
      %v920 = vpop.permute.xlu0 %919
      %v921 = vsel %vm327, %v917, 0
      %v923 = vsel %vm327, %v920, 0
      %925 = vmatprep.subr.mxu0 0.0
      %926 = vmatpush1.xpose.msra.mxu0 0.0
      %927 = vmatprep.subr.mxu0 0.0
      %928 = vmatpush1.xpose.msra.mxu0 0.0
      %929 = vmatprep.subr.mxu0 0.0
      %930 = vmatpush1.xpose.msra.mxu0 0.0
      %931 = vmatprep.subr.mxu0 0.0
      %932 = vmatpush1.xpose.msra.mxu0 0.0
      %933 = vmatprep.subr.mxu0 0.0
      %934 = vmatpush1.xpose.msra.mxu0 0.0
      %935 = vmatprep.subr.mxu0 0.0
      %936 = vmatpush1.xpose.msra.mxu0 0.0
      %937 = vmatprep.subr.mxu0 0.0
      %938 = vmatpush1.xpose.msra.mxu0 0.0
      %939 = vmatprep.subr.mxu0 0.0
      %940 = vmatpush1.xpose.msra.mxu0 0.0
      %941 = vmatprep.subr.mxu0 0.0
      %942 = vmatpush1.xpose.msra.mxu0 0.0
      %943 = vmatprep.subr.mxu0 0.0
      %944 = vmatpush1.xpose.msra.mxu0 0.0
      %945 = vmatprep.subr.mxu0 0.0
      %946 = vmatpush1.xpose.msra.mxu0 0.0
      %947 = vmatprep.subr.mxu0 0.0
      %948 = vmatpush1.xpose.msra.mxu0 0.0
      %949 = vmatprep.subr.mxu0 0.0
      %950 = vmatpush1.xpose.msra.mxu0 0.0
      %951 = vmatprep.subr.mxu0 0.0
      %952 = vmatpush1.xpose.msra.mxu0 0.0
      %953 = vmatprep.subr.mxu0 0.0
      %954 = vmatpush1.xpose.msra.mxu0 0.0
      %955 = vmatprep.subr.mxu0 0.0
      %956 = vmatpush1.xpose.msra.mxu0 %v923
      %957 = vmatprep.subr.mxu0 0.0
      %958 = vmatpush2.xpose.msra.mxu0 0.0
      %959 = vmatprep.subr.mxu0 0.0
      %960 = vmatpush2.xpose.msra.mxu0 0.0
      %961 = vmatprep.subr.mxu0 0.0
      %962 = vmatpush2.xpose.msra.mxu0 0.0
      %963 = vmatprep.subr.mxu0 0.0
      %964 = vmatpush2.xpose.msra.mxu0 0.0
      %965 = vmatprep.subr.mxu0 0.0
      %966 = vmatpush2.xpose.msra.mxu0 0.0
      %967 = vmatprep.subr.mxu0 0.0
      %968 = vmatpush2.xpose.msra.mxu0 0.0
      %969 = vmatprep.subr.mxu0 0.0
      %970 = vmatpush2.xpose.msra.mxu0 0.0
      %971 = vmatprep.subr.mxu0 0.0
      %972 = vmatpush2.xpose.msra.mxu0 0.0
      %973 = vmatprep.subr.mxu0 0.0
      %974 = vmatpush2.xpose.msra.mxu0 0.0
      %975 = vmatprep.subr.mxu0 0.0
      %976 = vmatpush2.xpose.msra.mxu0 0.0
      %977 = vmatprep.subr.mxu0 0.0
      %978 = vmatpush2.xpose.msra.mxu0 0.0
      %979 = vmatprep.subr.mxu0 0.0
      %980 = vmatpush2.xpose.msra.mxu0 0.0
      %981 = vmatprep.subr.mxu0 0.0
      %982 = vmatpush2.xpose.msra.mxu0 0.0
      %983 = vmatprep.subr.mxu0 0.0
      %984 = vmatpush2.xpose.msra.mxu0 0.0
      %985 = vmatprep.subr.mxu0 0.0
      %986 = vmatpush2.xpose.msra.mxu0 0.0
      %987 = vmatprep.subr.mxu0 0.0
      %988 = vmatpush2.xpose.msra.mxu0 0.0
      %989 = vmatprep.mubr.f32.mxu0 0.0
      %990 = vmatmul.mubr.f32.gmra.mxu0 %v921
      %v991 = vpop.f32.mrf.mxu0
      %v992 = vadd.f32 0.0, %v991
      %v993 = vpop.f32.mrf.mxu0
      %994 = vdwg.mxu0
      %v995 = vld [vmem:[#allocation2] sm:$0xff]
      %v996 = vsel %vm327, %v992, -inf
      %997 = vmax.xlane.f32.xlu0 %v996
      %v998 = vpop.xlane.xlu0 %997
      %v999 = vmax.f32 %v995, %v998
      %v1000 = vsub.f32 %v995, %v999
      %v1001 = vmul.f32 %v1000, 1.442695
      %v1002 = vpow.pop %v1001
      %1004 = vset.pattern.permute.xlu0 3
      %1005 = vperm.xlu0 %1004, %v999
      %v1006 = vpop.permute.xlu0 %1005
      %v1008 = vsub.f32 %v992, %v1006
      %v1009 = vmul.f32 %v1008, 1.442695
      %v1010 = vpow.pop %v1009
      %v1011 = vld [vmem:[#allocation3] sm:$0xff]
      %v1012 = vmul.f32 %v1002, %v1011
      %v1013 = vsel %vm327, %v1010, 0.0
      %1014 = vadd.xlane.f32.xlu0 %v1013
      %v1015 = vpop.xlane.xlu0 %1014
      %v1016 = vadd.f32 %v1012, %v1015
      %vm1017 = vcmask 31768
      %1018 = vst.msk [vmem:[#allocation3] sm:$0xff] %vm1017, %v1016
      %v1019 = vld [vmem:[#allocation4] sm:$0xff]
      %1021 = vset.pattern.permute.xlu0 3
      %1022 = vperm.xlu0 %1021, %v1002
      %v1023 = vpop.permute.xlu0 %1022
      %v1025 = vmul.f32 %v1023, %v1019
      %1027 = vrot.lane.b32.xlu0 %v914, 104
      %v1028 = vpop.permute.xlu0 %1027
      %v1031 = vsel %vm327, %v1010, 0
      %1033 = vmatprep.subr.mxu0 0.0
      %1034 = vmatpush1.msra.mxu0 0.0
      %1035 = vmatprep.subr.mxu0 0.0
      %1036 = vmatpush1.msra.mxu0 0.0
      %1037 = vmatprep.subr.mxu0 0.0
      %1038 = vmatpush1.msra.mxu0 0.0
      %1039 = vmatprep.subr.mxu0 0.0
      %1040 = vmatpush1.msra.mxu0 0.0
      %1041 = vmatprep.subr.mxu0 0.0
      %1042 = vmatpush1.msra.mxu0 0.0
      %1043 = vmatprep.subr.mxu0 0.0
      %1044 = vmatpush1.msra.mxu0 0.0
      %1045 = vmatprep.subr.mxu0 0.0
      %1046 = vmatpush1.msra.mxu0 0.0
      %1047 = vmatprep.subr.mxu0 0.0
      %1048 = vmatpush1.msra.mxu0 0.0
      %1049 = vmatprep.subr.mxu0 0.0
      %1050 = vmatpush1.msra.mxu0 0.0
      %1051 = vmatprep.subr.mxu0 0.0
      %1052 = vmatpush1.msra.mxu0 0.0
      %1053 = vmatprep.subr.mxu0 0.0
      %1054 = vmatpush1.msra.mxu0 0.0
      %1055 = vmatprep.subr.mxu0 0.0
      %1056 = vmatpush1.msra.mxu0 0.0
      %1057 = vmatprep.subr.mxu0 0.0
      %1058 = vmatpush1.msra.mxu0 0.0
      %1059 = vmatprep.subr.mxu0 0.0
      %1060 = vmatpush1.msra.mxu0 0.0
      %1061 = vmatprep.subr.mxu0 0.0
      %1062 = vmatpush1.msra.mxu0 0.0
      %1063 = vmatprep.subr.mxu0 0.0
      %1064 = vmatpush1.msra.mxu0 %v1028
      %1065 = vmatprep.subr.mxu0 0.0
      %1066 = vmatpush2.msra.mxu0 0.0
      %1067 = vmatprep.subr.mxu0 0.0
      %1068 = vmatpush2.msra.mxu0 0.0
      %1069 = vmatprep.subr.mxu0 0.0
      %1070 = vmatpush2.msra.mxu0 0.0
      %1071 = vmatprep.subr.mxu0 0.0
      %1072 = vmatpush2.msra.mxu0 0.0
      %1073 = vmatprep.subr.mxu0 0.0
      %1074 = vmatpush2.msra.mxu0 0.0
      %1075 = vmatprep.subr.mxu0 0.0
      %1076 = vmatpush2.msra.mxu0 0.0
      %1077 = vmatprep.subr.mxu0 0.0
      %1078 = vmatpush2.msra.mxu0 0.0
      %1079 = vmatprep.subr.mxu0 0.0
      %1080 = vmatpush2.msra.mxu0 0.0
      %1081 = vmatprep.subr.mxu0 0.0
      %1082 = vmatpush2.msra.mxu0 0.0
      %1083 = vmatprep.subr.mxu0 0.0
      %1084 = vmatpush2.msra.mxu0 0.0
      %1085 = vmatprep.subr.mxu0 0.0
      %1086 = vmatpush2.msra.mxu0 0.0
      %1087 = vmatprep.subr.mxu0 0.0
      %1088 = vmatpush2.msra.mxu0 0.0
      %1089 = vmatprep.subr.mxu0 0.0
      %1090 = vmatpush2.msra.mxu0 0.0
      %1091 = vmatprep.subr.mxu0 0.0
      %1092 = vmatpush2.msra.mxu0 0.0
      %1093 = vmatprep.subr.mxu0 0.0
      %1094 = vmatpush2.msra.mxu0 0.0
      %1095 = vmatprep.subr.mxu0 0.0
      %1096 = vmatpush2.msra.mxu0 0.0
      %1097 = vmatprep.mubr.f32.mxu0 0.0
      %1098 = vmatmul.mubr.f32.gmra.mxu0 %v1031
      %v1099 = vpop.f32.mrf.mxu0
      %v1100 = vadd.f32 0.0, %v1099
      %v1101 = vpop.f32.mrf.mxu0
      %1102 = vdwg.mxu0
      %1104 = vrot.lane.b32.xlu0 %v1100, 24
      %v1105 = vpop.permute.xlu0 %1104
      %v1107 = vadd.f32 %v1025, %v1105
      %vm1108 = vcmask 261312
      %1109 = vst.msk [vmem:[#allocation4] sm:$0xff] %vm1108, %v1107
      %1110 = vst.msk [vmem:[#allocation2] sm:$0xff] %vm1017, %v999
      // Predicated region
      $region37: #{flash_attention_forward.4} parent=31 // pred_check
        %p1111 = pneg %p314
      $region38: #{flash_attention_forward.4} parent=31 // pred_check_branch
        %1113 = sbr.rel (%p1111) target = $region40
      $region39: #{flash_attention_forward.4} parent=31 // pred_region
        %v1114 = vld [vmem:[#allocation4] sm:$0xff]
        %v1115 = vld [vmem:[#allocation3] sm:$0xff]
        %1117 = vset.pattern.permute.xlu0 0
        %1118 = vperm.xlu0 %1117, %v1115
        %v1119 = vpop.permute.xlu0 %1118
        %v1121 = vrcp.pop %v1119
        %v1122 = vmul.f32 %v1114, %v1121
        %1123 = vst.msk [vmem:[%s313] sm:$0xff] %vm327, %v1122
        %v1124 = vld [vmem:[#allocation4] sm:$0xff]
        %v1125 = vld [vmem:[#allocation3] sm:$0xff]
        %1127 = vset.pattern.permute.xlu0 1
        %1128 = vperm.xlu0 %1127, %v1125
        %v1129 = vpop.permute.xlu0 %1128
        %v1131 = vrcp.pop %v1129
        %v1132 = vmul.f32 %v1124, %v1131
        %1133 = vst.msk [vmem:[%s313] sm:$0xff] %vm708, %v1132
        %v1134 = vld [vmem:[#allocation4] sm:$0xff]
        %v1135 = vld [vmem:[#allocation3] sm:$0xff]
        %1137 = vset.pattern.permute.xlu0 2
        %1138 = vperm.xlu0 %1137, %v1135
        %v1139 = vpop.permute.xlu0 %1138
        %v1141 = vrcp.pop %v1139
        %v1142 = vmul.f32 %v1134, %v1141
        %1143 = vst.msk [vmem:[%s313] sm:$0xff] %vm908, %v1142
        %v1144 = vld [vmem:[#allocation4] sm:$0xff]
        %v1145 = vld [vmem:[#allocation3] sm:$0xff]
        %1147 = vset.pattern.permute.xlu0 3
        %1148 = vperm.xlu0 %1147, %v1145
        %v1149 = vpop.permute.xlu0 %1148
        %v1151 = vrcp.pop %v1149
        %v1152 = vmul.f32 %v1144, %v1151
        %1153 = vst.msk [vmem:[%s313] sm:$0xff] %vm1108, %v1152
      $region40: #{flash_attention_forward.4} parent=31 // pred_fallthru
        _
      %p1154 = scmp.lt.s32.totalorder %s20, 1
      %s1155 = scalar_select %p1154, %s20, 1
      %p1156 = scmp.lt.s32.totalorder %s22, 0
      %s1157 = scalar_select %p1156, %s22, 0
      %p1158 = scmp.lt.s32.totalorder %s21, 0
      %s1159 = scalar_select %p1158, %s21, 0
      %s1160 = sadd.s32 %s1159, %s1157
      %s1161 = sadd.s32 %s1160, %s1155
      %s1162 = smul.addr %s1161, 8
      %s1163 = scalar_lea.vmem %s3, %s1162
      // Predicated region
      $region41: #{flash_attention_forward.4} parent=31 // pred_check
        %p1164 = pneg %p152
      $region42: #{flash_attention_forward.4} parent=31 // pred_check_branch
        %1166 = sbr.rel (%p1164) target = $region44
      $region43: #{flash_attention_forward.4} parent=31 // pred_region
        _
      $region44: #{flash_attention_forward.4} parent=31 // pred_fallthru
        _
    $region32: #{flash_attention_forward.4} parent=5 // pred_fallthru
      _
    %p1167 = scmp.le.s32.totalorder 2, %s9
    // Predicated region
    $region45: #{flash_attention_forward.4} parent=5 // pred_check
      %p1168 = pneg %p1167
    $region46: #{flash_attention_forward.4} parent=5 // pred_check_branch
      %1170 = sbr.rel (%p1168) target = $region48
    $region47: #{flash_attention_forward.4} parent=5 // pred_region
      %s1171 = ssub.s32 %s9, 2
      // Predicated region
      $region49: #{flash_attention_forward.4} parent=47 // pred_check
        %p1172 = pneg %p158
      $region50: #{flash_attention_forward.4} parent=47 // pred_check_branch
        %1174 = sbr.rel (%p1172) target = $region52
      $region51: #{flash_attention_forward.4} parent=47 // pred_region
        %p1175 = scmp.lt.s32.totalorder %s24, 1
        %s1176 = scalar_select %p1175, %s24, 1
        %p1177 = scmp.lt.s32.totalorder %s26, 0
        %s1178 = scalar_select %p1177, %s26, 0
        %p1179 = scmp.lt.s32.totalorder %s25, 0
        %s1180 = scalar_select %p1179, %s25, 0
        %s1181 = sadd.s32 %s1180, %s1178
        %s1182 = sadd.s32 %s1181, %s1176
        %s1183 = smul.addr %s1182, 8
        %s1184 = scalar_lea.vmem %s3, %s1183
      $region52: #{flash_attention_forward.4} parent=47 // pred_fallthru
        _
    $region48: #{flash_attention_forward.4} parent=5 // pred_fallthru
      _
  $region6: #{flash_attention_forward.4} parent=0 // loop_footer
    %s13 = sadd.s32 1, %s9
  $region7: #{flash_attention_forward.4} parent=0 // loop_footer_branch
    %8 = sbr.rel target = $region3
  $region8: #{flash_attention_forward.4} parent=0 // loop_exit
    _

</llo_original>
